<compile_context>
chip_gen: v6e
topology: v6e:2x2x1
jax: 0.10.0
libtpu: 0.0.40
codegen_flags: <defaults>
</compile_context>

<pallas_src>
import functools
import math
from typing import NamedTuple

import jax
import jax.numpy as jnp
from jax.experimental import pallas as pl
from jax.experimental.pallas import tpu as pltpu


_SQRT_HALF = 1.0 / math.sqrt(2.0)
_LN_EPS = 1e-5


def _gelu_exact(t):
    # PyTorch nn.GELU() default = exact erf formulation.
    # (On v5e this erf polynomial may be the binding VALU cost; tanh-GELU on the
    #  EUP slot would be cheaper but changes numerics, so we keep parity.)
    return 0.5 * t * (1.0 + jax.lax.erf(t * _SQRT_HALF))


def _round_up(a, m):
    return ((a + m - 1) // m) * m


class _Cfg(NamedTuple):
    x_dim: int
    y_dim: int
    hd: int          # hidden_dim
    od: int          # decoder output dim (y_dim + x_dim)
    d_cat: int       # hidden + x_embed + noise_embed (LayerNorm width)
    slab_w: int      # lane width of the packed slabs / output (>= 128)
    # row offsets of weight matrices inside the packed weight slab
    r_wx1: int
    r_wx2: int
    r_wn1: int
    r_wn2: int
    r_wy1: int
    r_wy2: int
    r_wd1: int
    r_wd2: int
    # row indices of (1, slab_w) constants inside the packed vector slab
    i_bx1: int
    i_bx2: int
    i_nfreq: int
    i_nmask: int
    i_bn1: int
    i_bn2: int
    i_by1: int
    i_by2: int
    i_gamma: int
    i_beta: int
    i_bd1: int
    i_bd2: int


def _cdae_kernel(x_ref, y_ref, nl_ref, w_ref, v_ref, out_ref, *, cfg: _Cfg):
    f32 = jnp.float32
    W = cfg.slab_w

    def vec(i):                       # (1, slab_w) row constant
        return v_ref[i:i + 1, :]

    def mm(a, r0, k):                 # a @ packed weight block (full-lane output)
        return jnp.dot(a, w_ref[r0:r0 + k, :], preferred_element_type=f32)

    x = x_ref[...]                    # (tb, x_dim)
    y = y_ref[...]                    # (tb, y_dim)
    nl = nl_ref[...]                  # (tb, 1)

    # ---- x_proj: Linear -> GELU -> Linear; x_emb lands at lanes [od+hd, od+hd+xe)
    xh = _gelu_exact(mm(x, cfg.r_wx1, cfg.x_dim) + vec(cfg.i_bx1))
    x_pad = mm(xh, cfg.r_wx2, W) + vec(cfg.i_bx2)

    # ---- sinusoidal noise embedding (no concatenate) -------------------------
    # Full-width duplicated frequency table + 0/1 cos mask; padded lanes have
    # freq 0 and mask 0, so they evaluate to sin(0) = 0.
    args = nl * vec(cfg.i_nfreq)
    m = vec(cfg.i_nmask)
    emb = m * jnp.cos(args) + (1.0 - m) * jnp.sin(args)
    nh = _gelu_exact(mm(emb, cfg.r_wn1, W) + vec(cfg.i_bn1))
    n_pad = mm(nh, cfg.r_wn2, W) + vec(cfg.i_bn2)      # n_emb at lanes [od+hd+xe, ...)

    # ---- y_proj; h lands at lanes [od, od+hd) --------------------------------
    yh = _gelu_exact(mm(y, cfg.r_wy1, cfg.y_dim) + vec(cfg.i_by1))
    h_pad = mm(yh, cfg.r_wy2, W) + vec(cfg.i_by2)

    # ---- LayerNorm over the virtual concat [h | x_emb | n_emb] ---------------
    # The three pieces live at disjoint lanes [od, od+d_cat); everything else is 0.
    cat = h_pad + x_pad + n_pad
    inv_d = 1.0 / float(cfg.d_cat)
    mean = jnp.sum(cat, axis=-1, keepdims=True) * inv_d          # zeros add nothing
    d = cat - mean
    lane = jax.lax.broadcasted_iota(jnp.int32, (1, W), 1)
    live = (lane >= cfg.od) & (lane < cfg.od + cfg.d_cat)
    dm = jnp.where(live, d, 0.0)                                 # mask pad lanes
    var = jnp.sum(dm * dm, axis=-1, keepdims=True) * inv_d
    inv_std = jax.lax.rsqrt(var + _LN_EPS)
    cat_n = d * inv_std * vec(cfg.i_gamma) + vec(cfg.i_beta)     # pad lanes -> 0

    # ---- decoder: ONE fused Linear over the padded concat, GELU, Linear ------
    d1 = _gelu_exact(mm(cat_n, cfg.r_wd1, W) + vec(cfg.i_bd1))
    dec_pad = mm(d1, cfg.r_wd2, W) + vec(cfg.i_bd2)              # dec at lanes [0, od)

    # Lane-dense combined output: dec in [0, od), h in [od, od+hd), zeros beyond.
    out_ref[...] = (dec_pad + h_pad).astype(out_ref.dtype)


def pack_params(params, x_dim, y_dim):
    """Pack all weights/constants into two lane-dense slabs + static layout cfg."""
    xe = params["wx2"].shape[0]
    ne = params["wn1"].shape[0]
    hd = params["wy2"].shape[0]
    od = params["wd2"].shape[1]
    d_cat = hd + xe + ne
    slab_w = max(128, _round_up(od + d_cat, 128))
    off_h = od
    off_x = od + hd
    off_n = od + hd + xe

    def place(w, row_off, col_off, n_rows):
        blk = jnp.zeros((n_rows, slab_w), jnp.float32)
        return blk.at[row_off:row_off + w.shape[0],
                      col_off:col_off + w.shape[1]].set(w.astype(jnp.float32))

    # ---- weight-matrix slab: blocks stacked on 8-aligned row offsets ---------
    blocks, row_offs = [], []

    def add(blk):
        row_offs.append(sum(b.shape[0] for b in blocks))
        blocks.append(blk)

    add(place(params["wx1"], 0, 0, _round_up(x_dim, 8)))     # x   -> xh
    add(place(params["wx2"], 0, off_x, slab_w))              # xh  -> x_emb @ off_x
    add(place(params["wn1"], 0, 0, slab_w))                  # emb -> nh
    add(place(params["wn2"], 0, off_n, slab_w))              # nh  -> n_emb @ off_n
    add(place(params["wy1"], 0, 0, _round_up(y_dim, 8)))     # y   -> yh
    add(place(params["wy2"], 0, off_h, slab_w))              # yh  -> h @ off_h
    add(place(params["wd1"], off_h, 0, slab_w))              # cat -> d1 (one matmul)
    add(place(params["wd2"], 0, 0, slab_w))                  # d1  -> dec @ [0, od)
    w_slab = jnp.concatenate(blocks, axis=0)

    # ---- row-vector slab: biases, freq table, cos mask, LN gamma/beta --------
    half = params["freqs"].shape[1]
    freqs2 = jnp.concatenate([params["freqs"], params["freqs"]], axis=-1)
    cos_mask = jnp.concatenate(
        [jnp.zeros((1, half), jnp.float32), jnp.ones((1, half), jnp.float32)],
        axis=-1)

    vec_rows = [
        ("bx1", params["bx1"], 0),
        ("bx2", params["bx2"], off_x),
        ("nfreq", freqs2, 0),
        ("nmask", cos_mask, 0),
        ("bn1", params["bn1"], 0),
        ("bn2", params["bn2"], off_n),
        ("by1", params["by1"], 0),
        ("by2", params["by2"], off_h),
        ("gamma", params["ln_gamma"], off_h),
        ("beta", params["ln_beta"], off_h),
        ("bd1", params["bd1"], 0),
        ("bd2", params["bd2"], 0),
    ]
    v_slab = jnp.zeros((_round_up(len(vec_rows), 8), slab_w), jnp.float32)
    idx = {}
    for i, (name, v, col) in enumerate(vec_rows):
        v_slab = v_slab.at[i, col:col + v.shape[1]].set(v[0].astype(jnp.float32))
        idx[name] = i

    cfg = _Cfg(
        x_dim=x_dim, y_dim=y_dim, hd=hd, od=od, d_cat=d_cat, slab_w=slab_w,
        r_wx1=row_offs[0], r_wx2=row_offs[1], r_wn1=row_offs[2],
        r_wn2=row_offs[3], r_wy1=row_offs[4], r_wy2=row_offs[5],
        r_wd1=row_offs[6], r_wd2=row_offs[7],
        i_bx1=idx["bx1"], i_bx2=idx["bx2"], i_nfreq=idx["nfreq"],
        i_nmask=idx["nmask"], i_bn1=idx["bn1"], i_bn2=idx["bn2"],
        i_by1=idx["by1"], i_by2=idx["by2"], i_gamma=idx["gamma"],
        i_beta=idx["beta"], i_bd1=idx["bd1"], i_bd2=idx["bd2"],
    )
    return w_slab, v_slab, cfg


def cdae_forward(x, y_noisy, noise_level, w_slab, v_slab, cfg, *, batch_block=1024):
    """Fused forward of ConditionalDenoisingAutoencoderV2. Returns (dec_out, h)."""
    B = x.shape[0]
    # Batch tile: big enough to amortize per-step pipeline overhead (~0.35us),
    # small enough that large batches get >= ~8 "parallel" steps (v7x megacore).
    tb = min(batch_block, max(8, _round_up(pl.cdiv(B, 8), 8)))
    tb = _round_up(tb, 8)
    b_pad = _round_up(max(B, tb), tb)
    if b_pad != B:
        pad = b_pad - B
        x = jnp.pad(x, ((0, pad), (0, 0)))
        y_noisy = jnp.pad(y_noisy, ((0, pad), (0, 0)))
        noise_level = jnp.pad(noise_level, ((0, pad), (0, 0)))

    grid = (b_pad // tb,)
    W = cfg.slab_w

    def act_spec(d):
        return pl.BlockSpec((tb, d), lambda i: (i, 0))

    def whole(a):  # grid-invariant slab: DMA'd once, VMEM-resident across steps
        return pl.BlockSpec(a.shape, lambda i: (0, 0))

    flops = 2 * b_pad * W * (cfg.x_dim + cfg.y_dim + 6 * W)
    transcendentals = b_pad * 7 * W
    bytes_accessed = 4 * (b_pad * (cfg.x_dim + cfg.y_dim + 1 + W)
                          + int(w_slab.size) + int(v_slab.size))

    out = pl.pallas_call(
        functools.partial(_cdae_kernel, cfg=cfg),
        grid=grid,
        in_specs=[act_spec(cfg.x_dim), act_spec(cfg.y_dim), act_spec(1),
                  whole(w_slab), whole(v_slab)],
        out_specs=pl.BlockSpec((tb, W), lambda i: (i, 0)),
        out_shape=jax.ShapeDtypeStruct((b_pad, W), jnp.float32),
        compiler_params=pltpu.CompilerParams(
            dimension_semantics=("parallel",),
            vmem_limit_bytes=32 * 1024 * 1024),
        cost_estimate=pl.CostEstimate(
            flops=flops, transcendentals=transcendentals,
            bytes_accessed=bytes_accessed),
    )(x, y_noisy, noise_level, w_slab, v_slab)

    dec_out = out[:B, :cfg.od]
    h = out[:B, cfg.od:cfg.od + cfg.hd]
    return dec_out, h


def make_params(x_dim, y_dim, *, x_embed_dim=16, hidden_dim=64,
                noise_embed_dim=10, max_freq=10000.0,
                key=jax.random.PRNGKey(0)):
    """Deterministic synthetic parameters matching PyTorch Linear init (x @ W + b)."""

    def linear(k, fan_in, fan_out):
        kw, kb = jax.random.split(k)
        bound = 1.0 / math.sqrt(fan_in)
        w = jax.random.uniform(kw, (fan_in, fan_out), jnp.float32, -bound, bound)
        b = jax.random.uniform(kb, (1, fan_out), jnp.float32, -bound, bound)
        return w, b

    keys = jax.random.split(key, 8)
    wx1, bx1 = linear(keys[0], x_dim, x_embed_dim)
    wx2, bx2 = linear(keys[1], x_embed_dim, x_embed_dim)
    wn1, bn1 = linear(keys[2], noise_embed_dim, noise_embed_dim)
    wn2, bn2 = linear(keys[3], noise_embed_dim, noise_embed_dim)
    wy1, by1 = linear(keys[4], y_dim, hidden_dim)
    wy2, by2 = linear(keys[5], hidden_dim, hidden_dim)
    d_cat = hidden_dim + x_embed_dim + noise_embed_dim
    wd1, bd1 = linear(keys[6], d_cat, hidden_dim)
    wd2, bd2 = linear(keys[7], hidden_dim, y_dim + x_dim)

    half = noise_embed_dim // 2
    freqs = jnp.exp(jnp.linspace(math.log(1.0), math.log(max_freq),
                                 half)).astype(jnp.float32).reshape(1, half)

    return dict(
        wx1=wx1, bx1=bx1, wx2=wx2, bx2=bx2,
        freqs=freqs,
        wn1=wn1, bn1=bn1, wn2=wn2, bn2=bn2,
        wy1=wy1, by1=by1, wy2=wy2, by2=by2,
        ln_gamma=jnp.ones((1, d_cat), jnp.float32),
        ln_beta=jnp.zeros((1, d_cat), jnp.float32),
        wd1=wd1, bd1=bd1, wd2=wd2, bd2=bd2,
    )


def _reference(x, y_noisy, noise_level, p):
    """Pure-JAX mirror of the PyTorch module (concat-based, exact GELU)."""
    hp = jax.lax.Precision.HIGHEST

    def gelu(t):
        return 0.5 * t * (1.0 + jax.lax.erf(t * _SQRT_HALF))

    def lin(a, w, b):
        return jnp.dot(a, w, precision=hp) + b

    x_emb = lin(gelu(lin(x, p["wx1"], p["bx1"])), p["wx2"], p["bx2"])

    args = noise_level * p["freqs"]
    emb = jnp.concatenate([jnp.sin(args), jnp.cos(args)], axis=-1)
    n_emb = lin(gelu(lin(emb, p["wn1"], p["bn1"])), p["wn2"], p["bn2"])

    h = lin(gelu(lin(y_noisy, p["wy1"], p["by1"])), p["wy2"], p["by2"])

    dec_in = jnp.concatenate([h, x_emb, n_emb], axis=-1)
    mu = dec_in.mean(-1, keepdims=True)
    var = jnp.mean((dec_in - mu) ** 2, axis=-1, keepdims=True)
    dec_n = (dec_in - mu) / jnp.sqrt(var + _LN_EPS) * p["ln_gamma"] + p["ln_beta"]
    dec_out = lin(gelu(lin(dec_n, p["wd1"], p["bd1"])), p["wd2"], p["bd2"])
    return dec_out, h


if __name__ == "__main__":
    B, x_dim, y_dim = 8, 8, 16
    hidden_dim = 64

    key = jax.random.PRNGKey(0)
    pkey, kx, ky, kn = jax.random.split(key, 4)
    params = make_params(x_dim, y_dim, hidden_dim=hidden_dim, key=pkey)
    # TODO(synk): layout assumes out_dim + hidden + x_embed + noise_embed packs
    # into one slab width; for much larger dims the slab widens automatically
    # (slab_w > 128) at some extra padded-lane compute.
    w_slab, v_slab, cfg = pack_params(params, x_dim, y_dim)

    x = jax.random.normal(kx, (B, x_dim), jnp.float32)
    y_noisy = jax.random.normal(ky, (B, y_dim), jnp.float32)
    noise_level = jax.random.uniform(kn, (B, 1), jnp.float32)

    dec_out, h = cdae_forward(x, y_noisy, noise_level, w_slab, v_slab, cfg)
    dec_out = jax.block_until_ready(dec_out)
    h = jax.block_until_ready(h)

    ref_dec, ref_h = _reference(x, y_noisy, noise_level, params)

    assert dec_out.shape == (B, y_dim + x_dim)
    assert h.shape == (B, hidden_dim)
    assert jnp.allclose(h, ref_h, atol=1e-4, rtol=1e-4)
    assert jnp.allclose(dec_out, ref_dec, atol=1e-4, rtol=1e-4)

    print("KERNEL_OK")
</pallas_src>

<mosaic_0001>
module attributes {stable_mosaic.version = 11 : i64} {
  func.func @_cdae_kernel(%arg0: i32, %arg1: memref<8x8xf32, #tpu.memory_space<vmem>>, %arg2: memref<8x16xf32, #tpu.memory_space<vmem>>, %arg3: memref<8x1xf32, #tpu.memory_space<vmem>>, %arg4: memref<792x128xf32, #tpu.memory_space<vmem>>, %arg5: memref<16x128xf32, #tpu.memory_space<vmem>>, %arg6: memref<8x128xf32, #tpu.memory_space<vmem>>) attributes {dimension_semantics = [#tpu.dimension_semantics<parallel>], iteration_bounds = array<i64: 1>, scalar_prefetch = 0 : i64, scratch_operands = 0 : i64, tpu.core_type = #tpu.core_type<tc>, window_params = [{transform_indices = @transform_0, window_bounds = array<i64: 8, 8>}, {transform_indices = @transform_1, window_bounds = array<i64: 8, 16>}, {transform_indices = @transform_2, window_bounds = array<i64: 8, 1>}, {pipeline_mode = #tpu.pipeline_mode<synchronous>, transform_indices = @transform_3, window_bounds = array<i64: 792, 128>}, {pipeline_mode = #tpu.pipeline_mode<synchronous>, transform_indices = @transform_4, window_bounds = array<i64: 16, 128>}, {transform_indices = @transform_5, window_bounds = array<i64: 8, 128>}]} {
    %c0 = arith.constant 0 : index
    %c0_0 = arith.constant 0 : index
    %0 = vector.load %arg1[%c0, %c0_0] : memref<8x8xf32, #tpu.memory_space<vmem>>, vector<8x8xf32>
    %c0_1 = arith.constant 0 : index
    %c0_2 = arith.constant 0 : index
    %1 = vector.load %arg2[%c0_1, %c0_2] : memref<8x16xf32, #tpu.memory_space<vmem>>, vector<8x16xf32>
    %c0_3 = arith.constant 0 : index
    %c0_4 = arith.constant 0 : index
    %2 = vector.load %arg3[%c0_3, %c0_4] : memref<8x1xf32, #tpu.memory_space<vmem>>, vector<8x1xf32>
    %c0_5 = arith.constant 0 : index
    %c0_6 = arith.constant 0 : index
    %3 = vector.load %arg4[%c0_5, %c0_6] : memref<792x128xf32, #tpu.memory_space<vmem>>, vector<8x128xf32>
    %cst = arith.constant dense<0.000000e+00> : vector<8x128xf32>
    %4 = tpu.matmul %0, %3, %cst {dimension_numbers = #tpu.dot_dimension_numbers<[1], [0], [0], [1], [0, 0, 1, 1], [], []>} : vector<8x8xf32>, vector<8x128xf32>, vector<8x128xf32> -> vector<8x128xf32>
    %c0_7 = arith.constant 0 : index
    %c0_8 = arith.constant 0 : index
    %5 = vector.load %arg5[%c0_7, %c0_8] : memref<16x128xf32, #tpu.memory_space<vmem>>, vector<1x128xf32>
    %6 = vector.broadcast %5 : vector<1x128xf32> to vector<8x128xf32>
    %7 = arith.addf %4, %6 : vector<8x128xf32>
    %cst_9 = arith.constant 5.000000e-01 : f32
    %8 = vector.broadcast %cst_9 : f32 to vector<8x128xf32>
    %9 = arith.mulf %8, %7 : vector<8x128xf32>
    %cst_10 = arith.constant 0.707106769 : f32
    %10 = vector.broadcast %cst_10 : f32 to vector<8x128xf32>
    %11 = arith.mulf %7, %10 : vector<8x128xf32>
    %12 = math.erf %11 : vector<8x128xf32>
    %cst_11 = arith.constant 1.000000e+00 : f32
    %13 = vector.broadcast %cst_11 : f32 to vector<8x128xf32>
    %14 = arith.addf %13, %12 : vector<8x128xf32>
    %15 = arith.mulf %9, %14 : vector<8x128xf32>
    %c8 = arith.constant 8 : index
    %c0_12 = arith.constant 0 : index
    %16 = vector.load %arg4[%c8, %c0_12] : memref<792x128xf32, #tpu.memory_space<vmem>>, vector<128x128xf32>
    %cst_13 = arith.constant dense<0.000000e+00> : vector<8x128xf32>
    %17 = tpu.matmul %15, %16, %cst_13 {dimension_numbers = #tpu.dot_dimension_numbers<[1], [0], [0], [1], [0, 0, 1, 1], [], []>} : vector<8x128xf32>, vector<128x128xf32>, vector<8x128xf32> -> vector<8x128xf32>
    %c1 = arith.constant 1 : index
    %c0_14 = arith.constant 0 : index
    %18 = vector.load %arg5[%c1, %c0_14] : memref<16x128xf32, #tpu.memory_space<vmem>>, vector<1x128xf32>
    %19 = vector.broadcast %18 : vector<1x128xf32> to vector<8x128xf32>
    %20 = arith.addf %17, %19 : vector<8x128xf32>
    %c2 = arith.constant 2 : index
    %c0_15 = arith.constant 0 : index
    %21 = vector.load %arg5[%c2, %c0_15] : memref<16x128xf32, #tpu.memory_space<vmem>>, vector<1x128xf32>
    %22 = vector.broadcast %2 : vector<8x1xf32> to vector<8x128xf32>
    %23 = vector.broadcast %21 : vector<1x128xf32> to vector<8x128xf32>
    %24 = arith.mulf %22, %23 : vector<8x128xf32>
    %c3 = arith.constant 3 : index
    %c0_16 = arith.constant 0 : index
    %25 = vector.load %arg5[%c3, %c0_16] : memref<16x128xf32, #tpu.memory_space<vmem>>, vector<1x128xf32>
    %26 = math.cos %24 : vector<8x128xf32>
    %27 = vector.broadcast %25 : vector<1x128xf32> to vector<8x128xf32>
    %28 = arith.mulf %27, %26 : vector<8x128xf32>
    %cst_17 = arith.constant 1.000000e+00 : f32
    %29 = vector.broadcast %cst_17 : f32 to vector<1x128xf32>
    %30 = arith.subf %29, %25 : vector<1x128xf32>
    %31 = math.sin %24 : vector<8x128xf32>
    %32 = vector.broadcast %30 : vector<1x128xf32> to vector<8x128xf32>
    %33 = arith.mulf %32, %31 : vector<8x128xf32>
    %34 = arith.addf %28, %33 : vector<8x128xf32>
    %c136 = arith.constant 136 : index
    %c0_18 = arith.constant 0 : index
    %35 = vector.load %arg4[%c136, %c0_18] : memref<792x128xf32, #tpu.memory_space<vmem>>, vector<128x128xf32>
    %cst_19 = arith.constant dense<0.000000e+00> : vector<8x128xf32>
    %36 = tpu.matmul %34, %35, %cst_19 {dimension_numbers = #tpu.dot_dimension_numbers<[1], [0], [0], [1], [0, 0, 1, 1], [], []>} : vector<8x128xf32>, vector<128x128xf32>, vector<8x128xf32> -> vector<8x128xf32>
    %c4 = arith.constant 4 : index
    %c0_20 = arith.constant 0 : index
    %37 = vector.load %arg5[%c4, %c0_20] : memref<16x128xf32, #tpu.memory_space<vmem>>, vector<1x128xf32>
    %38 = vector.broadcast %37 : vector<1x128xf32> to vector<8x128xf32>
    %39 = arith.addf %36, %38 : vector<8x128xf32>
    %cst_21 = arith.constant 5.000000e-01 : f32
    %40 = vector.broadcast %cst_21 : f32 to vector<8x128xf32>
    %41 = arith.mulf %40, %39 : vector<8x128xf32>
    %cst_22 = arith.constant 0.707106769 : f32
    %42 = vector.broadcast %cst_22 : f32 to vector<8x128xf32>
    %43 = arith.mulf %39, %42 : vector<8x128xf32>
    %44 = math.erf %43 : vector<8x128xf32>
    %cst_23 = arith.constant 1.000000e+00 : f32
    %45 = vector.broadcast %cst_23 : f32 to vector<8x128xf32>
    %46 = arith.addf %45, %44 : vector<8x128xf32>
    %47 = arith.mulf %41, %46 : vector<8x128xf32>
    %c264 = arith.constant 264 : index
    %c0_24 = arith.constant 0 : index
    %48 = vector.load %arg4[%c264, %c0_24] : memref<792x128xf32, #tpu.memory_space<vmem>>, vector<128x128xf32>
    %cst_25 = arith.constant dense<0.000000e+00> : vector<8x128xf32>
    %49 = tpu.matmul %47, %48, %cst_25 {dimension_numbers = #tpu.dot_dimension_numbers<[1], [0], [0], [1], [0, 0, 1, 1], [], []>} : vector<8x128xf32>, vector<128x128xf32>, vector<8x128xf32> -> vector<8x128xf32>
    %c5 = arith.constant 5 : index
    %c0_26 = arith.constant 0 : index
    %50 = vector.load %arg5[%c5, %c0_26] : memref<16x128xf32, #tpu.memory_space<vmem>>, vector<1x128xf32>
    %51 = vector.broadcast %50 : vector<1x128xf32> to vector<8x128xf32>
    %52 = arith.addf %49, %51 : vector<8x128xf32>
    %c392 = arith.constant 392 : index
    %c0_27 = arith.constant 0 : index
    %53 = vector.load %arg4[%c392, %c0_27] : memref<792x128xf32, #tpu.memory_space<vmem>>, vector<16x128xf32>
    %cst_28 = arith.constant dense<0.000000e+00> : vector<8x128xf32>
    %54 = tpu.matmul %1, %53, %cst_28 {dimension_numbers = #tpu.dot_dimension_numbers<[1], [0], [0], [1], [0, 0, 1, 1], [], []>} : vector<8x16xf32>, vector<16x128xf32>, vector<8x128xf32> -> vector<8x128xf32>
    %c6 = arith.constant 6 : index
    %c0_29 = arith.constant 0 : index
    %55 = vector.load %arg5[%c6, %c0_29] : memref<16x128xf32, #tpu.memory_space<vmem>>, vector<1x128xf32>
    %56 = vector.broadcast %55 : vector<1x128xf32> to vector<8x128xf32>
    %57 = arith.addf %54, %56 : vector<8x128xf32>
    %cst_30 = arith.constant 5.000000e-01 : f32
    %58 = vector.broadcast %cst_30 : f32 to vector<8x128xf32>
    %59 = arith.mulf %58, %57 : vector<8x128xf32>
    %cst_31 = arith.constant 0.707106769 : f32
    %60 = vector.broadcast %cst_31 : f32 to vector<8x128xf32>
    %61 = arith.mulf %57, %60 : vector<8x128xf32>
    %62 = math.erf %61 : vector<8x128xf32>
    %cst_32 = arith.constant 1.000000e+00 : f32
    %63 = vector.broadcast %cst_32 : f32 to vector<8x128xf32>
    %64 = arith.addf %63, %62 : vector<8x128xf32>
    %65 = arith.mulf %59, %64 : vector<8x128xf32>
    %c408 = arith.constant 408 : index
    %c0_33 = arith.constant 0 : index
    %66 = vector.load %arg4[%c408, %c0_33] : memref<792x128xf32, #tpu.memory_space<vmem>>, vector<128x128xf32>
    %cst_34 = arith.constant dense<0.000000e+00> : vector<8x128xf32>
    %67 = tpu.matmul %65, %66, %cst_34 {dimension_numbers = #tpu.dot_dimension_numbers<[1], [0], [0], [1], [0, 0, 1, 1], [], []>} : vector<8x128xf32>, vector<128x128xf32>, vector<8x128xf32> -> vector<8x128xf32>
    %c7 = arith.constant 7 : index
    %c0_35 = arith.constant 0 : index
    %68 = vector.load %arg5[%c7, %c0_35] : memref<16x128xf32, #tpu.memory_space<vmem>>, vector<1x128xf32>
    %69 = vector.broadcast %68 : vector<1x128xf32> to vector<8x128xf32>
    %70 = arith.addf %67, %69 : vector<8x128xf32>
    %71 = arith.addf %70, %20 : vector<8x128xf32>
    %72 = arith.addf %71, %52 : vector<8x128xf32>
    %cst_36 = arith.constant dense<0.000000e+00> : vector<8xf32>
    %73 = vector.multi_reduction <add>, %72, %cst_36 [1] : vector<8x128xf32> to vector<8xf32>
    %74 = vector.shape_cast %73 : vector<8xf32> to vector<8x1xf32>
    %cst_37 = arith.constant 0.0111111114 : f32
    %75 = vector.broadcast %cst_37 : f32 to vector<8x1xf32>
    %76 = arith.mulf %74, %75 : vector<8x1xf32>
    %77 = vector.broadcast %76 : vector<8x1xf32> to vector<8x128xf32>
    %78 = arith.subf %72, %77 : vector<8x128xf32>
    %79 = tpu.iota {dimensions = array<i32: 1>} : vector<1x128xi32>
    %c24_i32 = arith.constant 24 : i32
    %80 = vector.broadcast %c24_i32 : i32 to vector<1x128xi32>
    %81 = arith.cmpi sge, %79, %80 : vector<1x128xi32>
    %c114_i32 = arith.constant 114 : i32
    %82 = vector.broadcast %c114_i32 : i32 to vector<1x128xi32>
    %83 = arith.cmpi slt, %79, %82 : vector<1x128xi32>
    %84 = arith.andi %81, %83 : vector<1x128xi1>
    %cst_38 = arith.constant 0.000000e+00 : f32
    %85 = vector.shape_cast %84 : vector<1x128xi1> to vector<1x128xi1>
    %86 = vector.broadcast %85 : vector<1x128xi1> to vector<8x128xi1>
    %87 = vector.broadcast %cst_38 : f32 to vector<8x128xf32>
    %88 = arith.select %86, %78, %87 : vector<8x128xi1>, vector<8x128xf32>
    %89 = arith.mulf %88, %88 : vector<8x128xf32>
    %cst_39 = arith.constant dense<0.000000e+00> : vector<8xf32>
    %90 = vector.multi_reduction <add>, %89, %cst_39 [1] : vector<8x128xf32> to vector<8xf32>
    %91 = vector.shape_cast %90 : vector<8xf32> to vector<8x1xf32>
    %cst_40 = arith.constant 0.0111111114 : f32
    %92 = vector.broadcast %cst_40 : f32 to vector<8x1xf32>
    %93 = arith.mulf %91, %92 : vector<8x1xf32>
    %cst_41 = arith.constant 9.99999974E-6 : f32
    %94 = vector.broadcast %cst_41 : f32 to vector<8x1xf32>
    %95 = arith.addf %93, %94 : vector<8x1xf32>
    %96 = math.rsqrt %95 : vector<8x1xf32>
    %97 = vector.broadcast %96 : vector<8x1xf32> to vector<8x128xf32>
    %98 = arith.mulf %78, %97 : vector<8x128xf32>
    %c8_42 = arith.constant 8 : index
    %c0_43 = arith.constant 0 : index
    %99 = vector.load %arg5[%c8_42, %c0_43] : memref<16x128xf32, #tpu.memory_space<vmem>>, vector<1x128xf32>
    %100 = vector.broadcast %99 : vector<1x128xf32> to vector<8x128xf32>
    %101 = arith.mulf %98, %100 : vector<8x128xf32>
    %c9 = arith.constant 9 : index
    %c0_44 = arith.constant 0 : index
    %102 = vector.load %arg5[%c9, %c0_44] : memref<16x128xf32, #tpu.memory_space<vmem>>, vector<1x128xf32>
    %103 = vector.broadcast %102 : vector<1x128xf32> to vector<8x128xf32>
    %104 = arith.addf %101, %103 : vector<8x128xf32>
    %c536 = arith.constant 536 : index
    %c0_45 = arith.constant 0 : index
    %105 = vector.load %arg4[%c536, %c0_45] : memref<792x128xf32, #tpu.memory_space<vmem>>, vector<128x128xf32>
    %cst_46 = arith.constant dense<0.000000e+00> : vector<8x128xf32>
    %106 = tpu.matmul %104, %105, %cst_46 {dimension_numbers = #tpu.dot_dimension_numbers<[1], [0], [0], [1], [0, 0, 1, 1], [], []>} : vector<8x128xf32>, vector<128x128xf32>, vector<8x128xf32> -> vector<8x128xf32>
    %c10 = arith.constant 10 : index
    %c0_47 = arith.constant 0 : index
    %107 = vector.load %arg5[%c10, %c0_47] : memref<16x128xf32, #tpu.memory_space<vmem>>, vector<1x128xf32>
    %108 = vector.broadcast %107 : vector<1x128xf32> to vector<8x128xf32>
    %109 = arith.addf %106, %108 : vector<8x128xf32>
    %cst_48 = arith.constant 5.000000e-01 : f32
    %110 = vector.broadcast %cst_48 : f32 to vector<8x128xf32>
    %111 = arith.mulf %110, %109 : vector<8x128xf32>
    %cst_49 = arith.constant 0.707106769 : f32
    %112 = vector.broadcast %cst_49 : f32 to vector<8x128xf32>
    %113 = arith.mulf %109, %112 : vector<8x128xf32>
    %114 = math.erf %113 : vector<8x128xf32>
    %cst_50 = arith.constant 1.000000e+00 : f32
    %115 = vector.broadcast %cst_50 : f32 to vector<8x128xf32>
    %116 = arith.addf %115, %114 : vector<8x128xf32>
    %117 = arith.mulf %111, %116 : vector<8x128xf32>
    %c664 = arith.constant 664 : index
    %c0_51 = arith.constant 0 : index
    %118 = vector.load %arg4[%c664, %c0_51] : memref<792x128xf32, #tpu.memory_space<vmem>>, vector<128x128xf32>
    %cst_52 = arith.constant dense<0.000000e+00> : vector<8x128xf32>
    %119 = tpu.matmul %117, %118, %cst_52 {dimension_numbers = #tpu.dot_dimension_numbers<[1], [0], [0], [1], [0, 0, 1, 1], [], []>} : vector<8x128xf32>, vector<128x128xf32>, vector<8x128xf32> -> vector<8x128xf32>
    %c11 = arith.constant 11 : index
    %c0_53 = arith.constant 0 : index
    %120 = vector.load %arg5[%c11, %c0_53] : memref<16x128xf32, #tpu.memory_space<vmem>>, vector<1x128xf32>
    %121 = vector.broadcast %120 : vector<1x128xf32> to vector<8x128xf32>
    %122 = arith.addf %119, %121 : vector<8x128xf32>
    %123 = arith.addf %122, %70 : vector<8x128xf32>
    %c0_54 = arith.constant 0 : index
    %c0_55 = arith.constant 0 : index
    %124 = vector.load %arg6[%c0_54, %c0_55] : memref<8x128xf32, #tpu.memory_space<vmem>>, vector<8x128xf32>
    tpu.vector_store %arg6[%c0_54, %c0_55], %123 {strides = array<i32>} : memref<8x128xf32, #tpu.memory_space<vmem>>, vector<8x128xf32>,
    return
  }
  func.func @transform_0(%arg0: i32) -> (i32, i32) {
    %c0_i32 = arith.constant 0 : i32
    %c0_i32_0 = arith.constant 0 : i32
    return %arg0, %c0_i32 : i32, i32
  }
  func.func @transform_1(%arg0: i32) -> (i32, i32) {
    %c0_i32 = arith.constant 0 : i32
    %c0_i32_0 = arith.constant 0 : i32
    return %arg0, %c0_i32 : i32, i32
  }
  func.func @transform_2(%arg0: i32) -> (i32, i32) {
    %c0_i32 = arith.constant 0 : i32
    %c0_i32_0 = arith.constant 0 : i32
    return %arg0, %c0_i32 : i32, i32
  }
  func.func @transform_3(%arg0: i32) -> (i32, i32) {
    %c0_i32 = arith.constant 0 : i32
    %c0_i32_0 = arith.constant 0 : i32
    %c0_i32_1 = arith.constant 0 : i32
    return %c0_i32, %c0_i32_0 : i32, i32
  }
  func.func @transform_4(%arg0: i32) -> (i32, i32) {
    %c0_i32 = arith.constant 0 : i32
    %c0_i32_0 = arith.constant 0 : i32
    %c0_i32_1 = arith.constant 0 : i32
    return %c0_i32, %c0_i32_0 : i32, i32
  }
  func.func @transform_5(%arg0: i32) -> (i32, i32) {
    %c0_i32 = arith.constant 0 : i32
    %c0_i32_0 = arith.constant 0 : i32
    return %arg0, %c0_i32 : i32, i32
  }
}

</mosaic_0001>

<llo_original>
// kernel: tpu_custom_call.1
$region0: #{tpu_custom_call.1}
  #allocation0 [shape = 'u32[]', space=smem, size = 0x4, offset = 0x4, fixed_abs, tag = 'smem constant byte address 0x4 - core index']
  #allocation1 [shape = 'u32[144,128]{1,0:T(1,128)}', space=vmem, size = 0x12000, scoped, tag = 'internal scratch']
  %s0 = inlined_call_operand.hbm [shape: f32[8,8], index: 0, kind: input, shape index: {}]
  %s1 = inlined_call_operand.hbm [shape: f32[8,16], index: 1, kind: input, shape index: {}]
  %s2 = inlined_call_operand.vmem [shape: f32[8,1], index: 2, kind: input, shape index: {}]
  %s3 = inlined_call_operand.hbm [shape: f32[792,128], index: 3, kind: input, shape index: {}]
  %s4 = inlined_call_operand.vmem [shape: f32[16,128], index: 4, kind: input, shape index: {}]
  %s5 = inlined_call_operand.hbm [shape: f32[8,128], index: 5, kind: output, shape index: {}]
  %s6 = sld [smem:[#allocation0]]
  $region42: #{tpu_custom_call.1} parent=0
    _
  %s8 = ssub.s32 1, %s6
  %s9 = scalar_select 0, %s8, %s6
  $region1: #{tpu_custom_call.1} parent=0
    #allocation2 [shape = 'u8[4096]{0}', space=vmem, size = 0x1000, scoped, tag = 'input window, operand 0, single buffered']
    #allocation3 [shape = 's32[1]{0}', space=sflag, size = 0x4, scoped, tag = 'scoped memory for tpu_custom_call.1']
    #allocation4 [shape = 's32[1]{0}', space=sflag, size = 0x4, scoped, tag = 'scoped memory for tpu_custom_call.1']
    #allocation5 [shape = 'u8[4096]{0}', space=vmem, size = 0x1000, scoped, tag = 'input window, operand 1, single buffered']
    #allocation6 [shape = 's32[1]{0}', space=sflag, size = 0x4, scoped, tag = 'scoped memory for tpu_custom_call.1']
    #allocation7 [shape = 'u8[405504]{0}', space=vmem, size = 0x63000, scoped, tag = 'input window, operand 3, single buffered']
    #allocation8 [shape = 'u8[4096]{0}', space=vmem, size = 0x1000, scoped, tag = 'output window, operand 0, single buffered']
    %10 = vsyncpa [#allocation3], 0
    %11 = vsyncpa [#allocation6], 0
    %12 = vsyncpa [#allocation4], 0
    // Predicated region
    $region2: #{tpu_custom_call.1} parent=1 // pred_check
      _
    $region3: #{tpu_custom_call.1} parent=1 // pred_check_branch
      %14 = sbr.rel (0) target = $region5
    $region4: #{tpu_custom_call.1} parent=1 // pred_region
      %s16 = ssub.s32 128, 128
      %17 = vsyncadd [#allocation3], %s16
      %s19 = sshll.u32 [#allocation2], 4
      %s20 = int_to_ptr.vmem [resolvable:$true] %s19
      %22 = dma.hbm_to_vmem [thread:$0]  %s0, 128, %s20, [#allocation3]
    $region5: #{tpu_custom_call.1} parent=1 // pred_fallthru
      _
    // Predicated region
    $region6: #{tpu_custom_call.1} parent=1 // pred_check
      _
    $region7: #{tpu_custom_call.1} parent=1 // pred_check_branch
      %24 = sbr.rel (0) target = $region9
    $region8: #{tpu_custom_call.1} parent=1 // pred_region
      %s26 = ssub.s32 128, 128
      %27 = vsyncadd [#allocation6], %s26
      %s29 = sshll.u32 [#allocation5], 4
      %s30 = int_to_ptr.vmem [resolvable:$true] %s29
      %32 = dma.hbm_to_vmem [thread:$0]  %s1, 128, %s30, [#allocation6]
    $region9: #{tpu_custom_call.1} parent=1 // pred_fallthru
      _
    // Predicated region
    $region10: #{tpu_custom_call.1} parent=1 // pred_check
      _
    $region11: #{tpu_custom_call.1} parent=1 // pred_check_branch
      %34 = sbr.rel (0) target = $region13
    $region12: #{tpu_custom_call.1} parent=1 // pred_region
      _
    $region13: #{tpu_custom_call.1} parent=1 // pred_fallthru
      _
    // Predicated region
    $region14: #{tpu_custom_call.1} parent=1 // pred_check
      _
    $region15: #{tpu_custom_call.1} parent=1 // pred_check_branch
      %36 = sbr.rel (0) target = $region17
    $region16: #{tpu_custom_call.1} parent=1 // pred_region
      %s38 = ssub.s32 12672, 12672
      %39 = vsyncadd [#allocation6], %s38
      %s40 = sshll.u32 [#allocation7], 4
      %s41 = int_to_ptr.vmem [resolvable:$true] %s40
      %46 = dma.hbm_to_vmem [thread:$0]  %s3, 12672, %s41, [#allocation6], 128, 128, 8
    $region17: #{tpu_custom_call.1} parent=1 // pred_fallthru
      _
    // Predicated region
    $region18: #{tpu_custom_call.1} parent=1 // pred_check
      _
    $region19: #{tpu_custom_call.1} parent=1 // pred_check_branch
      %48 = sbr.rel (0) target = $region21
    $region20: #{tpu_custom_call.1} parent=1 // pred_region
      _
    $region21: #{tpu_custom_call.1} parent=1 // pred_fallthru
      _
    // Predicated region
    $region22: #{tpu_custom_call.1} parent=1 // pred_check
      _
    $region23: #{tpu_custom_call.1} parent=1 // pred_check_branch
      %50 = sbr.rel (0) target = $region25
    $region24: #{tpu_custom_call.1} parent=1 // pred_region
      %51 = dma.done [#allocation3], 128
    $region25: #{tpu_custom_call.1} parent=1 // pred_fallthru
      _
    // Predicated region
    $region26: #{tpu_custom_call.1} parent=1 // pred_check
      _
    $region27: #{tpu_custom_call.1} parent=1 // pred_check_branch
      %53 = sbr.rel (0) target = $region29
    $region28: #{tpu_custom_call.1} parent=1 // pred_region
      %54 = dma.done [#allocation6], 128
    $region29: #{tpu_custom_call.1} parent=1 // pred_fallthru
      _
    // Predicated region
    $region30: #{tpu_custom_call.1} parent=1 // pred_check
      _
    $region31: #{tpu_custom_call.1} parent=1 // pred_check_branch
      %56 = sbr.rel (0) target = $region33
    $region32: #{tpu_custom_call.1} parent=1 // pred_region
      %57 = dma.done [#allocation6], 12672
    $region33: #{tpu_custom_call.1} parent=1 // pred_fallthru
      _
    %v58 = vld [vmem:[#allocation2] sm:$0xff]
    %v59 = vld [vmem:[#allocation5] sm:$0xff]
    %v60 = vld [vmem:[%s2] sm:$0xff]
    %v61 = vld [vmem:[#allocation7] sm:$0xff]
    %v62 = vld [vmem:[%s4] sm:$0x1]
    %v63 = vlaneseq
    %v64 = vshrl.u32 %v63, 7
    %v65 = vsub.s32 0, %v64
    %v66 = vrot.slane %v62, %v65
    %vm67 = vcmask 64512
    %v69 = vsel %vm67, %v58, 0
    %71 = vmatprep.subr.mxu0 0.0
    %72 = vmatpush1.msra.mxu0 0.0
    %73 = vmatprep.subr.mxu0 0.0
    %74 = vmatpush1.msra.mxu0 0.0
    %75 = vmatprep.subr.mxu0 0.0
    %76 = vmatpush1.msra.mxu0 0.0
    %77 = vmatprep.subr.mxu0 0.0
    %78 = vmatpush1.msra.mxu0 0.0
    %79 = vmatprep.subr.mxu0 0.0
    %80 = vmatpush1.msra.mxu0 0.0
    %81 = vmatprep.subr.mxu0 0.0
    %82 = vmatpush1.msra.mxu0 0.0
    %83 = vmatprep.subr.mxu0 0.0
    %84 = vmatpush1.msra.mxu0 0.0
    %85 = vmatprep.subr.mxu0 0.0
    %86 = vmatpush1.msra.mxu0 0.0
    %87 = vmatprep.subr.mxu0 0.0
    %88 = vmatpush1.msra.mxu0 0.0
    %89 = vmatprep.subr.mxu0 0.0
    %90 = vmatpush1.msra.mxu0 0.0
    %91 = vmatprep.subr.mxu0 0.0
    %92 = vmatpush1.msra.mxu0 0.0
    %93 = vmatprep.subr.mxu0 0.0
    %94 = vmatpush1.msra.mxu0 0.0
    %95 = vmatprep.subr.mxu0 0.0
    %96 = vmatpush1.msra.mxu0 0.0
    %97 = vmatprep.subr.mxu0 0.0
    %98 = vmatpush1.msra.mxu0 0.0
    %99 = vmatprep.subr.mxu0 0.0
    %100 = vmatpush1.msra.mxu0 0.0
    %101 = vmatprep.subr.mxu0 0.0
    %102 = vmatpush1.msra.mxu0 %v61
    %103 = vmatprep.subr.mxu0 0.0
    %104 = vmatpush2.msra.mxu0 0.0
    %105 = vmatprep.subr.mxu0 0.0
    %106 = vmatpush2.msra.mxu0 0.0
    %107 = vmatprep.subr.mxu0 0.0
    %108 = vmatpush2.msra.mxu0 0.0
    %109 = vmatprep.subr.mxu0 0.0
    %110 = vmatpush2.msra.mxu0 0.0
    %111 = vmatprep.subr.mxu0 0.0
    %112 = vmatpush2.msra.mxu0 0.0
    %113 = vmatprep.subr.mxu0 0.0
    %114 = vmatpush2.msra.mxu0 0.0
    %115 = vmatprep.subr.mxu0 0.0
    %116 = vmatpush2.msra.mxu0 0.0
    %117 = vmatprep.subr.mxu0 0.0
    %118 = vmatpush2.msra.mxu0 0.0
    %119 = vmatprep.subr.mxu0 0.0
    %120 = vmatpush2.msra.mxu0 0.0
    %121 = vmatprep.subr.mxu0 0.0
    %122 = vmatpush2.msra.mxu0 0.0
    %123 = vmatprep.subr.mxu0 0.0
    %124 = vmatpush2.msra.mxu0 0.0
    %125 = vmatprep.subr.mxu0 0.0
    %126 = vmatpush2.msra.mxu0 0.0
    %127 = vmatprep.subr.mxu0 0.0
    %128 = vmatpush2.msra.mxu0 0.0
    %129 = vmatprep.subr.mxu0 0.0
    %130 = vmatpush2.msra.mxu0 0.0
    %131 = vmatprep.subr.mxu0 0.0
    %132 = vmatpush2.msra.mxu0 0.0
    %133 = vmatprep.subr.mxu0 0.0
    %134 = vmatpush2.msra.mxu0 0.0
    %135 = vmatprep.mubr.f32.mxu0 0.0
    %136 = vmatmul.mubr.f32.gmra.mxu0 %v69
    %v137 = vpop.f32.mrf.mxu0
    %v138 = vadd.f32 %v66, %v137
    %v139 = vpop.f32.mrf.mxu0
    %140 = vdwg.mxu0
    %v141 = vmul.f32 %v138, 0.5
    %v142 = vmul.f32 %v138, 0.70710677
    %v143 = verf.f32.pop %v142
    %v144 = vadd.f32 %v143, 1.0
    %v145 = vmul.f32 %v141, %v144
    %v146 = vld [vmem:[#allocation7 + $0x8] sm:$0xff]
    %v147 = vld [vmem:[#allocation7 + $0x10] sm:$0xff]
    %v148 = vld [vmem:[#allocation7 + $0x18] sm:$0xff]
    %v149 = vld [vmem:[#allocation7 + $0x20] sm:$0xff]
    %v150 = vld [vmem:[#allocation7 + $0x28] sm:$0xff]
    %v151 = vld [vmem:[#allocation7 + $0x30] sm:$0xff]
    %v152 = vld [vmem:[#allocation7 + $0x38] sm:$0xff]
    %v153 = vld [vmem:[#allocation7 + $0x40] sm:$0xff]
    %v154 = vld [vmem:[#allocation7 + $0x48] sm:$0xff]
    %v155 = vld [vmem:[#allocation7 + $0x50] sm:$0xff]
    %v156 = vld [vmem:[#allocation7 + $0x58] sm:$0xff]
    %v157 = vld [vmem:[#allocation7 + $0x60] sm:$0xff]
    %v158 = vld [vmem:[#allocation7 + $0x68] sm:$0xff]
    %v159 = vld [vmem:[#allocation7 + $0x70] sm:$0xff]
    %v160 = vld [vmem:[#allocation7 + $0x78] sm:$0xff]
    %v161 = vld [vmem:[#allocation7 + $0x80] sm:$0xff]
    %v162 = vld [vmem:[%s4 + $0x1] sm:$0x1]
    %v163 = vlaneseq
    %v164 = vshrl.u32 %v163, 7
    %v165 = vsub.s32 0, %v164
    %v166 = vrot.slane %v162, %v165
    %167 = vmatprep.subr.mxu0 0.0
    %168 = vmatpush1.msra.mxu0 %v161
    %169 = vmatprep.subr.mxu0 0.0
    %170 = vmatpush1.msra.mxu0 %v160
    %171 = vmatprep.subr.mxu0 0.0
    %172 = vmatpush1.msra.mxu0 %v159
    %173 = vmatprep.subr.mxu0 0.0
    %174 = vmatpush1.msra.mxu0 %v158
    %175 = vmatprep.subr.mxu0 0.0
    %176 = vmatpush1.msra.mxu0 %v157
    %177 = vmatprep.subr.mxu0 0.0
    %178 = vmatpush1.msra.mxu0 %v156
    %179 = vmatprep.subr.mxu0 0.0
    %180 = vmatpush1.msra.mxu0 %v155
    %181 = vmatprep.subr.mxu0 0.0
    %182 = vmatpush1.msra.mxu0 %v154
    %183 = vmatprep.subr.mxu0 0.0
    %184 = vmatpush1.msra.mxu0 %v153
    %185 = vmatprep.subr.mxu0 0.0
    %186 = vmatpush1.msra.mxu0 %v152
    %187 = vmatprep.subr.mxu0 0.0
    %188 = vmatpush1.msra.mxu0 %v151
    %189 = vmatprep.subr.mxu0 0.0
    %190 = vmatpush1.msra.mxu0 %v150
    %191 = vmatprep.subr.mxu0 0.0
    %192 = vmatpush1.msra.mxu0 %v149
    %193 = vmatprep.subr.mxu0 0.0
    %194 = vmatpush1.msra.mxu0 %v148
    %195 = vmatprep.subr.mxu0 0.0
    %196 = vmatpush1.msra.mxu0 %v147
    %197 = vmatprep.subr.mxu0 0.0
    %198 = vmatpush1.msra.mxu0 %v146
    %199 = vmatprep.subr.mxu0 0.0
    %200 = vmatpush2.msra.mxu0 0.0
    %201 = vmatprep.subr.mxu0 0.0
    %202 = vmatpush2.msra.mxu0 0.0
    %203 = vmatprep.subr.mxu0 0.0
    %204 = vmatpush2.msra.mxu0 0.0
    %205 = vmatprep.subr.mxu0 0.0
    %206 = vmatpush2.msra.mxu0 0.0
    %207 = vmatprep.subr.mxu0 0.0
    %208 = vmatpush2.msra.mxu0 0.0
    %209 = vmatprep.subr.mxu0 0.0
    %210 = vmatpush2.msra.mxu0 0.0
    %211 = vmatprep.subr.mxu0 0.0
    %212 = vmatpush2.msra.mxu0 0.0
    %213 = vmatprep.subr.mxu0 0.0
    %214 = vmatpush2.msra.mxu0 0.0
    %215 = vmatprep.subr.mxu0 0.0
    %216 = vmatpush2.msra.mxu0 0.0
    %217 = vmatprep.subr.mxu0 0.0
    %218 = vmatpush2.msra.mxu0 0.0
    %219 = vmatprep.subr.mxu0 0.0
    %220 = vmatpush2.msra.mxu0 0.0
    %221 = vmatprep.subr.mxu0 0.0
    %222 = vmatpush2.msra.mxu0 0.0
    %223 = vmatprep.subr.mxu0 0.0
    %224 = vmatpush2.msra.mxu0 0.0
    %225 = vmatprep.subr.mxu0 0.0
    %226 = vmatpush2.msra.mxu0 0.0
    %227 = vmatprep.subr.mxu0 0.0
    %228 = vmatpush2.msra.mxu0 0.0
    %229 = vmatprep.subr.mxu0 0.0
    %230 = vmatpush2.msra.mxu0 0.0
    %231 = vmatprep.mubr.f32.mxu0 0.0
    %232 = vmatmul.mubr.f32.gmra.mxu0 %v145
    %v233 = vpop.f32.mrf.mxu0
    %v234 = vadd.f32 %v166, %v233
    %v235 = vpop.f32.mrf.mxu0
    %236 = vdwg.mxu0
    %v237 = vld [vmem:[%s4 + $0x2] sm:$0x1]
    %239 = vset.pattern.permute.xlu0 0
    %240 = vperm.xlu0 %239, %v60
    %v241 = vpop.permute.xlu0 %240
    %v243 = vlaneseq
    %v244 = vshrl.u32 %v243, 7
    %v245 = vsub.s32 0, %v244
    %v246 = vrot.slane %v237, %v245
    %v247 = vmul.f32 %v241, %v246
    %v248 = vld [vmem:[%s4 + $0x3] sm:$0x1]
    %v249 = vand.u32 2147483647, %v247
    %vm250 = vcmp.le.f32.partialorder %v249, 0.7853982
    %vm251 = vcmp.lt.s32.totalorder %v247, 0
    %v252 = vand.u32 %v247, 2139095040
    %v253 = vshrl.u32 %v252, 23
    %v254 = vsub.s32 %v253, 127
    %v255 = vand.u32 2147483647, %v247
    %v256 = vand.u32 %v255, 8388607
    %v257 = vor.u32 %v256, 8388608
    %v258 = vsub.s32 0, %v257
    %v259 = vadd.s32 %v254, 1
    %vm260 = vcmp.gt.s32.totalorder %v259, 0
    %v261 = vsel %vm260, %v259, 0
    %v262 = vshrl.u32 %v261, 5
    %v263 = vand.u32 %v261, 31
    %v264 = vsub.s32 32, %v263
    %v265 = vshrl.u32 683565275, %v264
    %v266 = vshll.u32 683565275, %v263
    %v267 = vshrl.u32 2475754826, %v264
    %v268 = vor.u32 %v266, %v267
    %v269 = vshll.u32 2475754826, %v263
    %v270 = vshrl.u32 2131351028, %v264
    %v271 = vor.u32 %v269, %v270
    %v272 = vshll.u32 2131351028, %v263
    %v273 = vshrl.u32 2102212464, %v264
    %v274 = vor.u32 %v272, %v273
    %v275 = vshll.u32 2102212464, %v263
    %v276 = vshrl.u32 920167782, %v264
    %v277 = vor.u32 %v275, %v276
    %v278 = vshll.u32 920167782, %v263
    %v279 = vshrl.u32 1326507024, %v264
    %v280 = vor.u32 %v278, %v279
    %vm281 = vcmp.lt.s32.totalorder %v262, 1
    %vm282 = vcmp.lt.s32.totalorder %v262, 2
    %vm283 = vcmp.lt.s32.totalorder %v262, 3
    %vm284 = vcmp.lt.s32.totalorder %v262, 4
    %v285 = vsel %vm281, %v265, %v268
    %v286 = vsel %vm284, %v274, 2102212464
    %v287 = vsel %vm283, %v271, %v286
    %v288 = vsel %vm282, %v285, %v287
    %v289 = vsel %vm281, %v268, %v271
    %v290 = vsel %vm284, %v277, 920167782
    %v291 = vsel %vm283, %v274, %v290
    %v292 = vsel %vm282, %v289, %v291
    %v293 = vsel %vm281, %v271, %v274
    %v294 = vsel %vm284, %v280, 1326507024
    %v295 = vsel %vm283, %v277, %v294
    %v296 = vsel %vm282, %v293, %v295
    %v297 = vshll.u32 %v257, 8
    %v298 = vmul.u32.u64.compose %v297, %v296
    %v299 = vextract.low.u32 %v298
    %v300 = vextract.high.u32 %v298
    %v301 = vmul.u32.u64.compose %v297, %v292
    %v302 = vextract.low.u32 %v301
    %v303 = vextract.high.u32 %v301
    %v304 = vmul.u32 %v297, %v288
    %v305 = vadd.s32 %v300, %v302
    %vm306 = vc.u32 %v300, %v302
    %v307 = vadd.s32 %v303, 1
    %v308 = vsel %vm306, %v307, %v303
    %v309 = vadd.s32 %v304, %v308
    %v310 = vadd.s32 %v309, 536870912
    %v311 = vshrl.u32 %v310, 30
    %v312 = vshll.u32 %v311, 30
    %v313 = vsub.s32 %v309, %v312
    %vm314 = vcmp.lt.s32.totalorder %v313, 0
    %v315 = vsub.s32 0, %v313
    %v316 = vsel %vm314, %v315, %v313
    %v317 = vclz %v316
    %v318 = vsub.s32 %v317, 2
    %vm319 = vcmp.gt.s32.totalorder 0, %v318
    %v320 = vsel %vm319, 0, %v318
    %v321 = vsub.s32 32, %v320
    %v322 = vshll.u32 %v313, %v320
    %v323 = vshrl.u32 %v305, %v321
    %v324 = vor.u32 %v322, %v323
    %v325 = vsub.s32 4294967266, %v320
    %v326 = vadd.s32 %v325, 127
    %v327 = vshll.u32 %v326, 23
    %v328 = vor.u32 4788187, %v327
    %v329 = vand.u32 2147483647, %v328
    %v331 = vcvt.s32.f32 %v324
    %v332 = vmul.f32 %v331, %v329
    %v333 = vxor.u32 %v332, 2147483648
    %v334 = vsel %vm251, %v333, %v332
    %v335 = vsub.s32 4, %v311
    %v336 = vsel %vm251, %v335, %v311
    %v337 = vsel %vm250, %v247, %v334
    %v338 = vsel %vm250, 0, %v336
    %v339 = vcosq.f32.pop %v337
    %v340 = vsinq.f32.pop %v337
    %vm341 = vweird.f32 %v247
    %v342 = vand.u32 %v338, 3
    %vm343 = vcmp.lt.s32.totalorder %v342, 2
    %vm344 = vcmp.eq.s32.totalorder %v342, 0
    %v345 = vxor.u32 %v340, 2147483648
    %v346 = vsel %vm344, %v339, %v345
    %vm347 = vcmp.eq.s32.totalorder %v342, 2
    %v348 = vxor.u32 %v339, 2147483648
    %v349 = vsel %vm347, %v348, %v340
    %v350 = vsel %vm343, %v346, %v349
    %v351 = vsel %vm341, nan, %v350
    %v352 = vlaneseq
    %v353 = vshrl.u32 %v352, 7
    %v354 = vsub.s32 0, %v353
    %v355 = vrot.slane %v248, %v354
    %v356 = vmul.f32 %v355, %v351
    %v357 = vsub.f32 1.0, %v248
    %v358 = vand.u32 2147483647, %v247
    %vm359 = vcmp.le.f32.partialorder %v358, 0.7853982
    %vm360 = vcmp.lt.s32.totalorder %v247, 0
    %v361 = vand.u32 %v247, 2139095040
    %v362 = vshrl.u32 %v361, 23
    %v363 = vsub.s32 %v362, 127
    %v364 = vand.u32 2147483647, %v247
    %v365 = vand.u32 %v364, 8388607
    %v366 = vor.u32 %v365, 8388608
    %v367 = vsub.s32 0, %v366
    %v368 = vadd.s32 %v363, 1
    %vm369 = vcmp.gt.s32.totalorder %v368, 0
    %v370 = vsel %vm369, %v368, 0
    %v371 = vshrl.u32 %v370, 5
    %v372 = vand.u32 %v370, 31
    %v373 = vsub.s32 32, %v372
    %v374 = vshrl.u32 683565275, %v373
    %v375 = vshll.u32 683565275, %v372
    %v376 = vshrl.u32 2475754826, %v373
    %v377 = vor.u32 %v375, %v376
    %v378 = vshll.u32 2475754826, %v372
    %v379 = vshrl.u32 2131351028, %v373
    %v380 = vor.u32 %v378, %v379
    %v381 = vshll.u32 2131351028, %v372
    %v382 = vshrl.u32 2102212464, %v373
    %v383 = vor.u32 %v381, %v382
    %v384 = vshll.u32 2102212464, %v372
    %v385 = vshrl.u32 920167782, %v373
    %v386 = vor.u32 %v384, %v385
    %v387 = vshll.u32 920167782, %v372
    %v388 = vshrl.u32 1326507024, %v373
    %v389 = vor.u32 %v387, %v388
    %vm390 = vcmp.lt.s32.totalorder %v371, 1
    %vm391 = vcmp.lt.s32.totalorder %v371, 2
    %vm392 = vcmp.lt.s32.totalorder %v371, 3
    %vm393 = vcmp.lt.s32.totalorder %v371, 4
    %v394 = vsel %vm390, %v374, %v377
    %v395 = vsel %vm393, %v383, 2102212464
    %v396 = vsel %vm392, %v380, %v395
    %v397 = vsel %vm391, %v394, %v396
    %v398 = vsel %vm390, %v377, %v380
    %v399 = vsel %vm393, %v386, 920167782
    %v400 = vsel %vm392, %v383, %v399
    %v401 = vsel %vm391, %v398, %v400
    %v402 = vsel %vm390, %v380, %v383
    %v403 = vsel %vm393, %v389, 1326507024
    %v404 = vsel %vm392, %v386, %v403
    %v405 = vsel %vm391, %v402, %v404
    %v406 = vshll.u32 %v366, 8
    %v407 = vmul.u32.u64.compose %v406, %v405
    %v408 = vextract.low.u32 %v407
    %v409 = vextract.high.u32 %v407
    %v410 = vmul.u32.u64.compose %v406, %v401
    %v411 = vextract.low.u32 %v410
    %v412 = vextract.high.u32 %v410
    %v413 = vmul.u32 %v406, %v397
    %v414 = vadd.s32 %v409, %v411
    %vm415 = vc.u32 %v409, %v411
    %v416 = vadd.s32 %v412, 1
    %v417 = vsel %vm415, %v416, %v412
    %v418 = vadd.s32 %v413, %v417
    %v419 = vadd.s32 %v418, 536870912
    %v420 = vshrl.u32 %v419, 30
    %v421 = vshll.u32 %v420, 30
    %v422 = vsub.s32 %v418, %v421
    %vm423 = vcmp.lt.s32.totalorder %v422, 0
    %v424 = vsub.s32 0, %v422
    %v425 = vsel %vm423, %v424, %v422
    %v426 = vclz %v425
    %v427 = vsub.s32 %v426, 2
    %vm428 = vcmp.gt.s32.totalorder 0, %v427
    %v429 = vsel %vm428, 0, %v427
    %v430 = vsub.s32 32, %v429
    %v431 = vshll.u32 %v422, %v429
    %v432 = vshrl.u32 %v414, %v430
    %v433 = vor.u32 %v431, %v432
    %v434 = vsub.s32 4294967266, %v429
    %v435 = vadd.s32 %v434, 127
    %v436 = vshll.u32 %v435, 23
    %v437 = vor.u32 4788187, %v436
    %v438 = vand.u32 2147483647, %v437
    %v440 = vcvt.s32.f32 %v433
    %v441 = vmul.f32 %v440, %v438
    %v442 = vxor.u32 %v441, 2147483648
    %v443 = vsel %vm360, %v442, %v441
    %v444 = vsub.s32 4, %v420
    %v445 = vsel %vm360, %v444, %v420
    %v446 = vsel %vm359, %v247, %v443
    %v447 = vsel %vm359, 0, %v445
    %v448 = vcosq.f32.pop %v446
    %v449 = vsinq.f32.pop %v446
    %vm450 = vweird.f32 %v247
    %v451 = vadd.s32 %v447, 3
    %v452 = vand.u32 %v451, 3
    %vm453 = vcmp.lt.s32.totalorder %v452, 2
    %vm454 = vcmp.eq.s32.totalorder %v452, 0
    %v455 = vxor.u32 %v449, 2147483648
    %v456 = vsel %vm454, %v448, %v455
    %vm457 = vcmp.eq.s32.totalorder %v452, 2
    %v458 = vxor.u32 %v448, 2147483648
    %v459 = vsel %vm457, %v458, %v449
    %v460 = vsel %vm453, %v456, %v459
    %v461 = vsel %vm450, nan, %v460
    %v462 = vlaneseq
    %v463 = vshrl.u32 %v462, 7
    %v464 = vsub.s32 0, %v463
    %v465 = vrot.slane %v357, %v464
    %v466 = vmul.f32 %v465, %v461
    %v467 = vadd.f32 %v356, %v466
    %v468 = vld [vmem:[#allocation7 + $0x88] sm:$0xff]
    %v469 = vld [vmem:[#allocation7 + $0x90] sm:$0xff]
    %v470 = vld [vmem:[#allocation7 + $0x98] sm:$0xff]
    %v471 = vld [vmem:[#allocation7 + $0xa0] sm:$0xff]
    %v472 = vld [vmem:[#allocation7 + $0xa8] sm:$0xff]
    %v473 = vld [vmem:[#allocation7 + $0xb0] sm:$0xff]
    %v474 = vld [vmem:[#allocation7 + $0xb8] sm:$0xff]
    %v475 = vld [vmem:[#allocation7 + $0xc0] sm:$0xff]
    %v476 = vld [vmem:[#allocation7 + $0xc8] sm:$0xff]
    %v477 = vld [vmem:[#allocation7 + $0xd0] sm:$0xff]
    %v478 = vld [vmem:[#allocation7 + $0xd8] sm:$0xff]
    %v479 = vld [vmem:[#allocation7 + $0xe0] sm:$0xff]
    %v480 = vld [vmem:[#allocation7 + $0xe8] sm:$0xff]
    %v481 = vld [vmem:[#allocation7 + $0xf0] sm:$0xff]
    %v482 = vld [vmem:[#allocation7 + $0xf8] sm:$0xff]
    %v483 = vld [vmem:[#allocation7 + $0x100] sm:$0xff]
    %v484 = vld [vmem:[%s4 + $0x4] sm:$0x1]
    %v485 = vlaneseq
    %v486 = vshrl.u32 %v485, 7
    %v487 = vsub.s32 0, %v486
    %v488 = vrot.slane %v484, %v487
    %489 = vmatprep.subr.mxu0 0.0
    %490 = vmatpush1.msra.mxu0 %v483
    %491 = vmatprep.subr.mxu0 0.0
    %492 = vmatpush1.msra.mxu0 %v482
    %493 = vmatprep.subr.mxu0 0.0
    %494 = vmatpush1.msra.mxu0 %v481
    %495 = vmatprep.subr.mxu0 0.0
    %496 = vmatpush1.msra.mxu0 %v480
    %497 = vmatprep.subr.mxu0 0.0
    %498 = vmatpush1.msra.mxu0 %v479
    %499 = vmatprep.subr.mxu0 0.0
    %500 = vmatpush1.msra.mxu0 %v478
    %501 = vmatprep.subr.mxu0 0.0
    %502 = vmatpush1.msra.mxu0 %v477
    %503 = vmatprep.subr.mxu0 0.0
    %504 = vmatpush1.msra.mxu0 %v476
    %505 = vmatprep.subr.mxu0 0.0
    %506 = vmatpush1.msra.mxu0 %v475
    %507 = vmatprep.subr.mxu0 0.0
    %508 = vmatpush1.msra.mxu0 %v474
    %509 = vmatprep.subr.mxu0 0.0
    %510 = vmatpush1.msra.mxu0 %v473
    %511 = vmatprep.subr.mxu0 0.0
    %512 = vmatpush1.msra.mxu0 %v472
    %513 = vmatprep.subr.mxu0 0.0
    %514 = vmatpush1.msra.mxu0 %v471
    %515 = vmatprep.subr.mxu0 0.0
    %516 = vmatpush1.msra.mxu0 %v470
    %517 = vmatprep.subr.mxu0 0.0
    %518 = vmatpush1.msra.mxu0 %v469
    %519 = vmatprep.subr.mxu0 0.0
    %520 = vmatpush1.msra.mxu0 %v468
    %521 = vmatprep.subr.mxu0 0.0
    %522 = vmatpush2.msra.mxu0 0.0
    %523 = vmatprep.subr.mxu0 0.0
    %524 = vmatpush2.msra.mxu0 0.0
    %525 = vmatprep.subr.mxu0 0.0
    %526 = vmatpush2.msra.mxu0 0.0
    %527 = vmatprep.subr.mxu0 0.0
    %528 = vmatpush2.msra.mxu0 0.0
    %529 = vmatprep.subr.mxu0 0.0
    %530 = vmatpush2.msra.mxu0 0.0
    %531 = vmatprep.subr.mxu0 0.0
    %532 = vmatpush2.msra.mxu0 0.0
    %533 = vmatprep.subr.mxu0 0.0
    %534 = vmatpush2.msra.mxu0 0.0
    %535 = vmatprep.subr.mxu0 0.0
    %536 = vmatpush2.msra.mxu0 0.0
    %537 = vmatprep.subr.mxu0 0.0
    %538 = vmatpush2.msra.mxu0 0.0
    %539 = vmatprep.subr.mxu0 0.0
    %540 = vmatpush2.msra.mxu0 0.0
    %541 = vmatprep.subr.mxu0 0.0
    %542 = vmatpush2.msra.mxu0 0.0
    %543 = vmatprep.subr.mxu0 0.0
    %544 = vmatpush2.msra.mxu0 0.0
    %545 = vmatprep.subr.mxu0 0.0
    %546 = vmatpush2.msra.mxu0 0.0
    %547 = vmatprep.subr.mxu0 0.0
    %548 = vmatpush2.msra.mxu0 0.0
    %549 = vmatprep.subr.mxu0 0.0
    %550 = vmatpush2.msra.mxu0 0.0
    %551 = vmatprep.subr.mxu0 0.0
    %552 = vmatpush2.msra.mxu0 0.0
    %553 = vmatprep.mubr.f32.mxu0 0.0
    %554 = vmatmul.mubr.f32.gmra.mxu0 %v467
    %v555 = vpop.f32.mrf.mxu0
    %v556 = vadd.f32 %v488, %v555
    %v557 = vpop.f32.mrf.mxu0
    %558 = vdwg.mxu0
    %v559 = vmul.f32 %v556, 0.5
    %v560 = vmul.f32 %v556, 0.70710677
    %v561 = verf.f32.pop %v560
    %v562 = vadd.f32 %v561, 1.0
    %v563 = vmul.f32 %v559, %v562
    %v564 = vld [vmem:[#allocation7 + $0x108] sm:$0xff]
    %v565 = vld [vmem:[#allocation7 + $0x110] sm:$0xff]
    %v566 = vld [vmem:[#allocation7 + $0x118] sm:$0xff]
    %v567 = vld [vmem:[#allocation7 + $0x120] sm:$0xff]
    %v568 = vld [vmem:[#allocation7 + $0x128] sm:$0xff]
    %v569 = vld [vmem:[#allocation7 + $0x130] sm:$0xff]
    %v570 = vld [vmem:[#allocation7 + $0x138] sm:$0xff]
    %v571 = vld [vmem:[#allocation7 + $0x140] sm:$0xff]
    %v572 = vld [vmem:[#allocation7 + $0x148] sm:$0xff]
    %v573 = vld [vmem:[#allocation7 + $0x150] sm:$0xff]
    %v574 = vld [vmem:[#allocation7 + $0x158] sm:$0xff]
    %v575 = vld [vmem:[#allocation7 + $0x160] sm:$0xff]
    %v576 = vld [vmem:[#allocation7 + $0x168] sm:$0xff]
    %v577 = vld [vmem:[#allocation7 + $0x170] sm:$0xff]
    %v578 = vld [vmem:[#allocation7 + $0x178] sm:$0xff]
    %v579 = vld [vmem:[#allocation7 + $0x180] sm:$0xff]
    %v580 = vld [vmem:[%s4 + $0x5] sm:$0x1]
    %v581 = vlaneseq
    %v582 = vshrl.u32 %v581, 7
    %v583 = vsub.s32 0, %v582
    %v584 = vrot.slane %v580, %v583
    %585 = vmatprep.subr.mxu0 0.0
    %586 = vmatpush1.msra.mxu0 %v579
    %587 = vmatprep.subr.mxu0 0.0
    %588 = vmatpush1.msra.mxu0 %v578
    %589 = vmatprep.subr.mxu0 0.0
    %590 = vmatpush1.msra.mxu0 %v577
    %591 = vmatprep.subr.mxu0 0.0
    %592 = vmatpush1.msra.mxu0 %v576
    %593 = vmatprep.subr.mxu0 0.0
    %594 = vmatpush1.msra.mxu0 %v575
    %595 = vmatprep.subr.mxu0 0.0
    %596 = vmatpush1.msra.mxu0 %v574
    %597 = vmatprep.subr.mxu0 0.0
    %598 = vmatpush1.msra.mxu0 %v573
    %599 = vmatprep.subr.mxu0 0.0
    %600 = vmatpush1.msra.mxu0 %v572
    %601 = vmatprep.subr.mxu0 0.0
    %602 = vmatpush1.msra.mxu0 %v571
    %603 = vmatprep.subr.mxu0 0.0
    %604 = vmatpush1.msra.mxu0 %v570
    %605 = vmatprep.subr.mxu0 0.0
    %606 = vmatpush1.msra.mxu0 %v569
    %607 = vmatprep.subr.mxu0 0.0
    %608 = vmatpush1.msra.mxu0 %v568
    %609 = vmatprep.subr.mxu0 0.0
    %610 = vmatpush1.msra.mxu0 %v567
    %611 = vmatprep.subr.mxu0 0.0
    %612 = vmatpush1.msra.mxu0 %v566
    %613 = vmatprep.subr.mxu0 0.0
    %614 = vmatpush1.msra.mxu0 %v565
    %615 = vmatprep.subr.mxu0 0.0
    %616 = vmatpush1.msra.mxu0 %v564
    %617 = vmatprep.subr.mxu0 0.0
    %618 = vmatpush2.msra.mxu0 0.0
    %619 = vmatprep.subr.mxu0 0.0
    %620 = vmatpush2.msra.mxu0 0.0
    %621 = vmatprep.subr.mxu0 0.0
    %622 = vmatpush2.msra.mxu0 0.0
    %623 = vmatprep.subr.mxu0 0.0
    %624 = vmatpush2.msra.mxu0 0.0
    %625 = vmatprep.subr.mxu0 0.0
    %626 = vmatpush2.msra.mxu0 0.0
    %627 = vmatprep.subr.mxu0 0.0
    %628 = vmatpush2.msra.mxu0 0.0
    %629 = vmatprep.subr.mxu0 0.0
    %630 = vmatpush2.msra.mxu0 0.0
    %631 = vmatprep.subr.mxu0 0.0
    %632 = vmatpush2.msra.mxu0 0.0
    %633 = vmatprep.subr.mxu0 0.0
    %634 = vmatpush2.msra.mxu0 0.0
    %635 = vmatprep.subr.mxu0 0.0
    %636 = vmatpush2.msra.mxu0 0.0
    %637 = vmatprep.subr.mxu0 0.0
    %638 = vmatpush2.msra.mxu0 0.0
    %639 = vmatprep.subr.mxu0 0.0
    %640 = vmatpush2.msra.mxu0 0.0
    %641 = vmatprep.subr.mxu0 0.0
    %642 = vmatpush2.msra.mxu0 0.0
    %643 = vmatprep.subr.mxu0 0.0
    %644 = vmatpush2.msra.mxu0 0.0
    %645 = vmatprep.subr.mxu0 0.0
    %646 = vmatpush2.msra.mxu0 0.0
    %647 = vmatprep.subr.mxu0 0.0
    %648 = vmatpush2.msra.mxu0 0.0
    %649 = vmatprep.mubr.f32.mxu0 0.0
    %650 = vmatmul.mubr.f32.gmra.mxu0 %v563
    %v651 = vpop.f32.mrf.mxu0
    %v652 = vadd.f32 %v584, %v651
    %v653 = vpop.f32.mrf.mxu0
    %654 = vdwg.mxu0
    %v655 = vld [vmem:[#allocation7 + $0x188] sm:$0xff]
    %v656 = vld [vmem:[#allocation7 + $0x190] sm:$0xff]
    %v657 = vld [vmem:[%s4 + $0x6] sm:$0x1]
    %v658 = vlaneseq
    %v659 = vshrl.u32 %v658, 7
    %v660 = vsub.s32 0, %v659
    %v661 = vrot.slane %v657, %v660
    %vm662 = vcmask 130048
    %v664 = vsel %vm662, %v59, 0
    %666 = vmatprep.subr.mxu0 0.0
    %667 = vmatpush1.msra.mxu0 0.0
    %668 = vmatprep.subr.mxu0 0.0
    %669 = vmatpush1.msra.mxu0 0.0
    %670 = vmatprep.subr.mxu0 0.0
    %671 = vmatpush1.msra.mxu0 0.0
    %672 = vmatprep.subr.mxu0 0.0
    %673 = vmatpush1.msra.mxu0 0.0
    %674 = vmatprep.subr.mxu0 0.0
    %675 = vmatpush1.msra.mxu0 0.0
    %676 = vmatprep.subr.mxu0 0.0
    %677 = vmatpush1.msra.mxu0 0.0
    %678 = vmatprep.subr.mxu0 0.0
    %679 = vmatpush1.msra.mxu0 0.0
    %680 = vmatprep.subr.mxu0 0.0
    %681 = vmatpush1.msra.mxu0 0.0
    %682 = vmatprep.subr.mxu0 0.0
    %683 = vmatpush1.msra.mxu0 0.0
    %684 = vmatprep.subr.mxu0 0.0
    %685 = vmatpush1.msra.mxu0 0.0
    %686 = vmatprep.subr.mxu0 0.0
    %687 = vmatpush1.msra.mxu0 0.0
    %688 = vmatprep.subr.mxu0 0.0
    %689 = vmatpush1.msra.mxu0 0.0
    %690 = vmatprep.subr.mxu0 0.0
    %691 = vmatpush1.msra.mxu0 0.0
    %692 = vmatprep.subr.mxu0 0.0
    %693 = vmatpush1.msra.mxu0 0.0
    %694 = vmatprep.subr.mxu0 0.0
    %695 = vmatpush1.msra.mxu0 %v656
    %696 = vmatprep.subr.mxu0 0.0
    %697 = vmatpush1.msra.mxu0 %v655
    %698 = vmatprep.subr.mxu0 0.0
    %699 = vmatpush2.msra.mxu0 0.0
    %700 = vmatprep.subr.mxu0 0.0
    %701 = vmatpush2.msra.mxu0 0.0
    %702 = vmatprep.subr.mxu0 0.0
    %703 = vmatpush2.msra.mxu0 0.0
    %704 = vmatprep.subr.mxu0 0.0
    %705 = vmatpush2.msra.mxu0 0.0
    %706 = vmatprep.subr.mxu0 0.0
    %707 = vmatpush2.msra.mxu0 0.0
    %708 = vmatprep.subr.mxu0 0.0
    %709 = vmatpush2.msra.mxu0 0.0
    %710 = vmatprep.subr.mxu0 0.0
    %711 = vmatpush2.msra.mxu0 0.0
    %712 = vmatprep.subr.mxu0 0.0
    %713 = vmatpush2.msra.mxu0 0.0
    %714 = vmatprep.subr.mxu0 0.0
    %715 = vmatpush2.msra.mxu0 0.0
    %716 = vmatprep.subr.mxu0 0.0
    %717 = vmatpush2.msra.mxu0 0.0
    %718 = vmatprep.subr.mxu0 0.0
    %719 = vmatpush2.msra.mxu0 0.0
    %720 = vmatprep.subr.mxu0 0.0
    %721 = vmatpush2.msra.mxu0 0.0
    %722 = vmatprep.subr.mxu0 0.0
    %723 = vmatpush2.msra.mxu0 0.0
    %724 = vmatprep.subr.mxu0 0.0
    %725 = vmatpush2.msra.mxu0 0.0
    %726 = vmatprep.subr.mxu0 0.0
    %727 = vmatpush2.msra.mxu0 0.0
    %728 = vmatprep.subr.mxu0 0.0
    %729 = vmatpush2.msra.mxu0 0.0
    %730 = vmatprep.mubr.f32.mxu0 0.0
    %731 = vmatmul.mubr.f32.gmra.mxu0 %v664
    %v732 = vpop.f32.mrf.mxu0
    %v733 = vadd.f32 %v661, %v732
    %v734 = vpop.f32.mrf.mxu0
    %735 = vdwg.mxu0
    %v736 = vmul.f32 %v733, 0.5
    %v737 = vmul.f32 %v733, 0.70710677
    %v738 = verf.f32.pop %v737
    %v739 = vadd.f32 %v738, 1.0
    %v740 = vmul.f32 %v736, %v739
    %v741 = vld [vmem:[#allocation7 + $0x198] sm:$0xff]
    %v742 = vld [vmem:[#allocation7 + $0x1a0] sm:$0xff]
    %v743 = vld [vmem:[#allocation7 + $0x1a8] sm:$0xff]
    %v744 = vld [vmem:[#allocation7 + $0x1b0] sm:$0xff]
    %v745 = vld [vmem:[#allocation7 + $0x1b8] sm:$0xff]
    %v746 = vld [vmem:[#allocation7 + $0x1c0] sm:$0xff]
    %v747 = vld [vmem:[#allocation7 + $0x1c8] sm:$0xff]
    %v748 = vld [vmem:[#allocation7 + $0x1d0] sm:$0xff]
    %v749 = vld [vmem:[#allocation7 + $0x1d8] sm:$0xff]
    %v750 = vld [vmem:[#allocation7 + $0x1e0] sm:$0xff]
    %v751 = vld [vmem:[#allocation7 + $0x1e8] sm:$0xff]
    %v752 = vld [vmem:[#allocation7 + $0x1f0] sm:$0xff]
    %v753 = vld [vmem:[#allocation7 + $0x1f8] sm:$0xff]
    %v754 = vld [vmem:[#allocation7 + $0x200] sm:$0xff]
    %v755 = vld [vmem:[#allocation7 + $0x208] sm:$0xff]
    %v756 = vld [vmem:[#allocation7 + $0x210] sm:$0xff]
    %v757 = vld [vmem:[%s4 + $0x7] sm:$0x1]
    %v758 = vlaneseq
    %v759 = vshrl.u32 %v758, 7
    %v760 = vsub.s32 0, %v759
    %v761 = vrot.slane %v757, %v760
    %762 = vmatprep.subr.mxu0 0.0
    %763 = vmatpush1.msra.mxu0 %v756
    %764 = vmatprep.subr.mxu0 0.0
    %765 = vmatpush1.msra.mxu0 %v755
    %766 = vmatprep.subr.mxu0 0.0
    %767 = vmatpush1.msra.mxu0 %v754
    %768 = vmatprep.subr.mxu0 0.0
    %769 = vmatpush1.msra.mxu0 %v753
    %770 = vmatprep.subr.mxu0 0.0
    %771 = vmatpush1.msra.mxu0 %v752
    %772 = vmatprep.subr.mxu0 0.0
    %773 = vmatpush1.msra.mxu0 %v751
    %774 = vmatprep.subr.mxu0 0.0
    %775 = vmatpush1.msra.mxu0 %v750
    %776 = vmatprep.subr.mxu0 0.0
    %777 = vmatpush1.msra.mxu0 %v749
    %778 = vmatprep.subr.mxu0 0.0
    %779 = vmatpush1.msra.mxu0 %v748
    %780 = vmatprep.subr.mxu0 0.0
    %781 = vmatpush1.msra.mxu0 %v747
    %782 = vmatprep.subr.mxu0 0.0
    %783 = vmatpush1.msra.mxu0 %v746
    %784 = vmatprep.subr.mxu0 0.0
    %785 = vmatpush1.msra.mxu0 %v745
    %786 = vmatprep.subr.mxu0 0.0
    %787 = vmatpush1.msra.mxu0 %v744
    %788 = vmatprep.subr.mxu0 0.0
    %789 = vmatpush1.msra.mxu0 %v743
    %790 = vmatprep.subr.mxu0 0.0
    %791 = vmatpush1.msra.mxu0 %v742
    %792 = vmatprep.subr.mxu0 0.0
    %793 = vmatpush1.msra.mxu0 %v741
    %794 = vmatprep.subr.mxu0 0.0
    %795 = vmatpush2.msra.mxu0 0.0
    %796 = vmatprep.subr.mxu0 0.0
    %797 = vmatpush2.msra.mxu0 0.0
    %798 = vmatprep.subr.mxu0 0.0
    %799 = vmatpush2.msra.mxu0 0.0
    %800 = vmatprep.subr.mxu0 0.0
    %801 = vmatpush2.msra.mxu0 0.0
    %802 = vmatprep.subr.mxu0 0.0
    %803 = vmatpush2.msra.mxu0 0.0
    %804 = vmatprep.subr.mxu0 0.0
    %805 = vmatpush2.msra.mxu0 0.0
    %806 = vmatprep.subr.mxu0 0.0
    %807 = vmatpush2.msra.mxu0 0.0
    %808 = vmatprep.subr.mxu0 0.0
    %809 = vmatpush2.msra.mxu0 0.0
    %810 = vmatprep.subr.mxu0 0.0
    %811 = vmatpush2.msra.mxu0 0.0
    %812 = vmatprep.subr.mxu0 0.0
    %813 = vmatpush2.msra.mxu0 0.0
    %814 = vmatprep.subr.mxu0 0.0
    %815 = vmatpush2.msra.mxu0 0.0
    %816 = vmatprep.subr.mxu0 0.0
    %817 = vmatpush2.msra.mxu0 0.0
    %818 = vmatprep.subr.mxu0 0.0
    %819 = vmatpush2.msra.mxu0 0.0
    %820 = vmatprep.subr.mxu0 0.0
    %821 = vmatpush2.msra.mxu0 0.0
    %822 = vmatprep.subr.mxu0 0.0
    %823 = vmatpush2.msra.mxu0 0.0
    %824 = vmatprep.subr.mxu0 0.0
    %825 = vmatpush2.msra.mxu0 0.0
    %826 = vmatprep.mubr.f32.mxu0 0.0
    %827 = vmatmul.mubr.f32.gmra.mxu0 %v740
    %v828 = vpop.f32.mrf.mxu0
    %v829 = vadd.f32 %v761, %v828
    %v830 = vpop.f32.mrf.mxu0
    %831 = vdwg.mxu0
    %v832 = vadd.f32 %v829, %v234
    %v833 = vadd.f32 %v832, %v652
    %834 = vadd.xlane.f32.xlu0 %v833
    %v835 = vpop.xlane.xlu0 %834
    %v836 = vmul.f32 %v835, 0.011111111
    %v837 = vsub.f32 %v833, %v836
    %v838 = vlaneseq
    %v839 = vand.u32 %v838, 127
    %vm840 = vcmp.ge.s32.totalorder %v839, 24
    %vm841 = vcmp.lt.s32.totalorder %v839, 114
    %vm842 = vmand %vm840, %vm841
    %v843 = vsel %vm842, 1, 0
    %vm844 = vcmp.eq.s32.totalorder %v843, 1
    %v845 = vsel %vm844, %v837, 0.0
    %v846 = vmul.f32 %v845, %v845
    %847 = vadd.xlane.f32.xlu0 %v846
    %v848 = vpop.xlane.xlu0 %847
    %v849 = vmul.f32 %v848, 0.011111111
    %v850 = vadd.f32 %v849, 1e-05
    %v851 = vrsqrt.pop %v850
    %v852 = vmul.f32 %v837, %v851
    %v853 = vld [vmem:[%s4 + $0x8] sm:$0x1]
    %v854 = vlaneseq
    %v855 = vshrl.u32 %v854, 7
    %v856 = vsub.s32 0, %v855
    %v857 = vrot.slane %v853, %v856
    %v858 = vmul.f32 %v852, %v857
    %v859 = vld [vmem:[%s4 + $0x9] sm:$0x1]
    %v860 = vlaneseq
    %v861 = vshrl.u32 %v860, 7
    %v862 = vsub.s32 0, %v861
    %v863 = vrot.slane %v859, %v862
    %v864 = vadd.f32 %v858, %v863
    %v865 = vld [vmem:[#allocation7 + $0x218] sm:$0xff]
    %v866 = vld [vmem:[#allocation7 + $0x220] sm:$0xff]
    %v867 = vld [vmem:[#allocation7 + $0x228] sm:$0xff]
    %v868 = vld [vmem:[#allocation7 + $0x230] sm:$0xff]
    %v869 = vld [vmem:[#allocation7 + $0x238] sm:$0xff]
    %v870 = vld [vmem:[#allocation7 + $0x240] sm:$0xff]
    %v871 = vld [vmem:[#allocation7 + $0x248] sm:$0xff]
    %v872 = vld [vmem:[#allocation7 + $0x250] sm:$0xff]
    %v873 = vld [vmem:[#allocation7 + $0x258] sm:$0xff]
    %v874 = vld [vmem:[#allocation7 + $0x260] sm:$0xff]
    %v875 = vld [vmem:[#allocation7 + $0x268] sm:$0xff]
    %v876 = vld [vmem:[#allocation7 + $0x270] sm:$0xff]
    %v877 = vld [vmem:[#allocation7 + $0x278] sm:$0xff]
    %v878 = vld [vmem:[#allocation7 + $0x280] sm:$0xff]
    %v879 = vld [vmem:[#allocation7 + $0x288] sm:$0xff]
    %v880 = vld [vmem:[#allocation7 + $0x290] sm:$0xff]
    %v881 = vld [vmem:[%s4 + $0xa] sm:$0x1]
    %v882 = vlaneseq
    %v883 = vshrl.u32 %v882, 7
    %v884 = vsub.s32 0, %v883
    %v885 = vrot.slane %v881, %v884
    %886 = vmatprep.subr.mxu0 0.0
    %887 = vmatpush1.msra.mxu0 %v880
    %888 = vmatprep.subr.mxu0 0.0
    %889 = vmatpush1.msra.mxu0 %v879
    %890 = vmatprep.subr.mxu0 0.0
    %891 = vmatpush1.msra.mxu0 %v878
    %892 = vmatprep.subr.mxu0 0.0
    %893 = vmatpush1.msra.mxu0 %v877
    %894 = vmatprep.subr.mxu0 0.0
    %895 = vmatpush1.msra.mxu0 %v876
    %896 = vmatprep.subr.mxu0 0.0
    %897 = vmatpush1.msra.mxu0 %v875
    %898 = vmatprep.subr.mxu0 0.0
    %899 = vmatpush1.msra.mxu0 %v874
    %900 = vmatprep.subr.mxu0 0.0
    %901 = vmatpush1.msra.mxu0 %v873
    %902 = vmatprep.subr.mxu0 0.0
    %903 = vmatpush1.msra.mxu0 %v872
    %904 = vmatprep.subr.mxu0 0.0
    %905 = vmatpush1.msra.mxu0 %v871
    %906 = vmatprep.subr.mxu0 0.0
    %907 = vmatpush1.msra.mxu0 %v870
    %908 = vmatprep.subr.mxu0 0.0
    %909 = vmatpush1.msra.mxu0 %v869
    %910 = vmatprep.subr.mxu0 0.0
    %911 = vmatpush1.msra.mxu0 %v868
    %912 = vmatprep.subr.mxu0 0.0
    %913 = vmatpush1.msra.mxu0 %v867
    %914 = vmatprep.subr.mxu0 0.0
    %915 = vmatpush1.msra.mxu0 %v866
    %916 = vmatprep.subr.mxu0 0.0
    %917 = vmatpush1.msra.mxu0 %v865
    %918 = vmatprep.subr.mxu0 0.0
    %919 = vmatpush2.msra.mxu0 0.0
    %920 = vmatprep.subr.mxu0 0.0
    %921 = vmatpush2.msra.mxu0 0.0
    %922 = vmatprep.subr.mxu0 0.0
    %923 = vmatpush2.msra.mxu0 0.0
    %924 = vmatprep.subr.mxu0 0.0
    %925 = vmatpush2.msra.mxu0 0.0
    %926 = vmatprep.subr.mxu0 0.0
    %927 = vmatpush2.msra.mxu0 0.0
    %928 = vmatprep.subr.mxu0 0.0
    %929 = vmatpush2.msra.mxu0 0.0
    %930 = vmatprep.subr.mxu0 0.0
    %931 = vmatpush2.msra.mxu0 0.0
    %932 = vmatprep.subr.mxu0 0.0
    %933 = vmatpush2.msra.mxu0 0.0
    %934 = vmatprep.subr.mxu0 0.0
    %935 = vmatpush2.msra.mxu0 0.0
    %936 = vmatprep.subr.mxu0 0.0
    %937 = vmatpush2.msra.mxu0 0.0
    %938 = vmatprep.subr.mxu0 0.0
    %939 = vmatpush2.msra.mxu0 0.0
    %940 = vmatprep.subr.mxu0 0.0
    %941 = vmatpush2.msra.mxu0 0.0
    %942 = vmatprep.subr.mxu0 0.0
    %943 = vmatpush2.msra.mxu0 0.0
    %944 = vmatprep.subr.mxu0 0.0
    %945 = vmatpush2.msra.mxu0 0.0
    %946 = vmatprep.subr.mxu0 0.0
    %947 = vmatpush2.msra.mxu0 0.0
    %948 = vmatprep.subr.mxu0 0.0
    %949 = vmatpush2.msra.mxu0 0.0
    %950 = vmatprep.mubr.f32.mxu0 0.0
    %951 = vmatmul.mubr.f32.gmra.mxu0 %v864
    %v952 = vpop.f32.mrf.mxu0
    %v953 = vadd.f32 %v885, %v952
    %v954 = vpop.f32.mrf.mxu0
    %955 = vdwg.mxu0
    %v956 = vmul.f32 %v953, 0.5
    %v957 = vmul.f32 %v953, 0.70710677
    %v958 = verf.f32.pop %v957
    %v959 = vadd.f32 %v958, 1.0
    %v960 = vmul.f32 %v956, %v959
    %v961 = vld [vmem:[#allocation7 + $0x298] sm:$0xff]
    %v962 = vld [vmem:[#allocation7 + $0x2a0] sm:$0xff]
    %v963 = vld [vmem:[#allocation7 + $0x2a8] sm:$0xff]
    %v964 = vld [vmem:[#allocation7 + $0x2b0] sm:$0xff]
    %v965 = vld [vmem:[#allocation7 + $0x2b8] sm:$0xff]
    %v966 = vld [vmem:[#allocation7 + $0x2c0] sm:$0xff]
    %v967 = vld [vmem:[#allocation7 + $0x2c8] sm:$0xff]
    %v968 = vld [vmem:[#allocation7 + $0x2d0] sm:$0xff]
    %v969 = vld [vmem:[#allocation7 + $0x2d8] sm:$0xff]
    %v970 = vld [vmem:[#allocation7 + $0x2e0] sm:$0xff]
    %v971 = vld [vmem:[#allocation7 + $0x2e8] sm:$0xff]
    %v972 = vld [vmem:[#allocation7 + $0x2f0] sm:$0xff]
    %v973 = vld [vmem:[#allocation7 + $0x2f8] sm:$0xff]
    %v974 = vld [vmem:[#allocation7 + $0x300] sm:$0xff]
    %v975 = vld [vmem:[#allocation7 + $0x308] sm:$0xff]
    %v976 = vld [vmem:[#allocation7 + $0x310] sm:$0xff]
    %v977 = vld [vmem:[%s4 + $0xb] sm:$0x1]
    %v978 = vlaneseq
    %v979 = vshrl.u32 %v978, 7
    %v980 = vsub.s32 0, %v979
    %v981 = vrot.slane %v977, %v980
    %982 = vmatprep.subr.mxu0 0.0
    %983 = vmatpush1.msra.mxu0 %v976
    %984 = vmatprep.subr.mxu0 0.0
    %985 = vmatpush1.msra.mxu0 %v975
    %986 = vmatprep.subr.mxu0 0.0
    %987 = vmatpush1.msra.mxu0 %v974
    %988 = vmatprep.subr.mxu0 0.0
    %989 = vmatpush1.msra.mxu0 %v973
    %990 = vmatprep.subr.mxu0 0.0
    %991 = vmatpush1.msra.mxu0 %v972
    %992 = vmatprep.subr.mxu0 0.0
    %993 = vmatpush1.msra.mxu0 %v971
    %994 = vmatprep.subr.mxu0 0.0
    %995 = vmatpush1.msra.mxu0 %v970
    %996 = vmatprep.subr.mxu0 0.0
    %997 = vmatpush1.msra.mxu0 %v969
    %998 = vmatprep.subr.mxu0 0.0
    %999 = vmatpush1.msra.mxu0 %v968
    %1000 = vmatprep.subr.mxu0 0.0
    %1001 = vmatpush1.msra.mxu0 %v967
    %1002 = vmatprep.subr.mxu0 0.0
    %1003 = vmatpush1.msra.mxu0 %v966
    %1004 = vmatprep.subr.mxu0 0.0
    %1005 = vmatpush1.msra.mxu0 %v965
    %1006 = vmatprep.subr.mxu0 0.0
    %1007 = vmatpush1.msra.mxu0 %v964
    %1008 = vmatprep.subr.mxu0 0.0
    %1009 = vmatpush1.msra.mxu0 %v963
    %1010 = vmatprep.subr.mxu0 0.0
    %1011 = vmatpush1.msra.mxu0 %v962
    %1012 = vmatprep.subr.mxu0 0.0
    %1013 = vmatpush1.msra.mxu0 %v961
    %1014 = vmatprep.subr.mxu0 0.0
    %1015 = vmatpush2.msra.mxu0 0.0
    %1016 = vmatprep.subr.mxu0 0.0
    %1017 = vmatpush2.msra.mxu0 0.0
    %1018 = vmatprep.subr.mxu0 0.0
    %1019 = vmatpush2.msra.mxu0 0.0
    %1020 = vmatprep.subr.mxu0 0.0
    %1021 = vmatpush2.msra.mxu0 0.0
    %1022 = vmatprep.subr.mxu0 0.0
    %1023 = vmatpush2.msra.mxu0 0.0
    %1024 = vmatprep.subr.mxu0 0.0
    %1025 = vmatpush2.msra.mxu0 0.0
    %1026 = vmatprep.subr.mxu0 0.0
    %1027 = vmatpush2.msra.mxu0 0.0
    %1028 = vmatprep.subr.mxu0 0.0
    %1029 = vmatpush2.msra.mxu0 0.0
    %1030 = vmatprep.subr.mxu0 0.0
    %1031 = vmatpush2.msra.mxu0 0.0
    %1032 = vmatprep.subr.mxu0 0.0
    %1033 = vmatpush2.msra.mxu0 0.0
    %1034 = vmatprep.subr.mxu0 0.0
    %1035 = vmatpush2.msra.mxu0 0.0
    %1036 = vmatprep.subr.mxu0 0.0
    %1037 = vmatpush2.msra.mxu0 0.0
    %1038 = vmatprep.subr.mxu0 0.0
    %1039 = vmatpush2.msra.mxu0 0.0
    %1040 = vmatprep.subr.mxu0 0.0
    %1041 = vmatpush2.msra.mxu0 0.0
    %1042 = vmatprep.subr.mxu0 0.0
    %1043 = vmatpush2.msra.mxu0 0.0
    %1044 = vmatprep.subr.mxu0 0.0
    %1045 = vmatpush2.msra.mxu0 0.0
    %1046 = vmatprep.mubr.f32.mxu0 0.0
    %1047 = vmatmul.mubr.f32.gmra.mxu0 %v960
    %v1048 = vpop.f32.mrf.mxu0
    %v1049 = vadd.f32 %v981, %v1048
    %v1050 = vpop.f32.mrf.mxu0
    %1051 = vdwg.mxu0
    %v1052 = vadd.f32 %v1049, %v829
    %1053 = vst [vmem:[#allocation8] sm:$0xff] %v1052
    // Predicated region
    $region34: #{tpu_custom_call.1} parent=1 // pred_check
      _
    $region35: #{tpu_custom_call.1} parent=1 // pred_check_branch
      %1055 = sbr.rel (0) target = $region37
    $region36: #{tpu_custom_call.1} parent=1 // pred_region
      %s1057 = ssub.s32 128, 128
      %1058 = vsyncadd [#allocation4], %s1057
      %s1060 = sshll.u32 [#allocation8], 4
      %s1061 = int_to_ptr.vmem [resolvable:$true] %s1060
      %1063 = dma.vmem_to_hbm [thread:$0]  %s1061, 128, %s5, [#allocation4]
    $region37: #{tpu_custom_call.1} parent=1 // pred_fallthru
      _
    // Predicated region
    $region38: #{tpu_custom_call.1} parent=1 // pred_check
      _
    $region39: #{tpu_custom_call.1} parent=1 // pred_check_branch
      %1065 = sbr.rel (0) target = $region41
    $region40: #{tpu_custom_call.1} parent=1 // pred_region
      %1066 = dma.done [#allocation4], 128
    $region41: #{tpu_custom_call.1} parent=1 // pred_fallthru
      _
    %1067 = vsyncpa [#allocation3], 1
    %1068 = vsyncpa [#allocation6], 1
    %1069 = vsyncpa [#allocation4], 1

</llo_original>
